<compile_context>
chip_gen: v7x
topology: tpu7x:2x2x1
jax: 0.10.0
libtpu: 0.0.40
codegen_flags: <defaults>
</compile_context>

<pallas_src>
import functools

import jax
import jax.numpy as jnp
from jax.experimental import pallas as pl
from jax.experimental.pallas import tpu as pltpu

LOG_SIG_MAX = 2.0
LOG_SIG_MIN = -5.0
MEAN_MAX = 9.0
MEAN_MIN = -9.0

_LANE = 128
_SUBLANE = 8


def _round_up(x, m):
    return ((x + m - 1) // m) * m


# --------------------------------------------------------------------------
# Kernel
# --------------------------------------------------------------------------
def _densenet_policy_kernel(num_layers, input_dim_pad, hidden_pad, head_pad,
                            action_dim,
                            x_ref, w_ref, b_ref, out_ref, h_ref):
    """One batch tile of the DenseNetPolicy forward.

    x_ref  : [block_b, input_dim_pad]   (mxu dtype, zero-padded columns)
    w_ref  : [feat_pad, num_layers*hidden_pad + head_pad]   packed weights
    b_ref  : [1,        num_layers*hidden_pad + head_pad]   packed biases (f32)
    out_ref: [block_b, head_pad]  columns [0:A] = mean, [A:2A] = std
    h_ref  : VMEM scratch [block_b, feat_pad]  (replaces the concat buffer)
    """
    mxu_dtype = h_ref.dtype

    # DenseNet feature buffer: zero-init once, then fill static, lane-aligned
    # column slabs.  Zero columns x zero weight rows keep the math identical
    # to the unpadded concat while every matmul reads one resident buffer.
    h_ref[...] = jnp.zeros_like(h_ref)
    h_ref[:, 0:input_dim_pad] = x_ref[...].astype(mxu_dtype)

    for i in range(num_layers):
        c0 = i * hidden_pad
        w = w_ref[:, c0:c0 + hidden_pad]                       # [feat_pad, H_pad]
        b = b_ref[:, c0:c0 + hidden_pad].astype(jnp.float32)   # [1, H_pad]
        z = jnp.dot(h_ref[...], w, preferred_element_type=jnp.float32) + b
        # SiLU = z * sigmoid(z).  approx=True would push the reciprocal fully
        # onto the EUP but loosens the numerical match with the reference.
        sig = pl.reciprocal(1.0 + jnp.exp(-z), approx=False)
        act = z * sig
        h_ref[:, input_dim_pad + c0:input_dim_pad + c0 + hidden_pad] = (
            act.astype(mxu_dtype))

    # Fused mean / log_std head: a single lane-dense matmul, then per-column
    # select between clipped mean and exp(clipped log_std).
    c0 = num_layers * hidden_pad
    w_head = w_ref[:, c0:c0 + head_pad]                        # [feat_pad, 128]
    b_head = b_ref[:, c0:c0 + head_pad].astype(jnp.float32)
    z = jnp.dot(h_ref[...], w_head, preferred_element_type=jnp.float32) + b_head

    mean = jnp.clip(z, MEAN_MIN, MEAN_MAX)
    std = jnp.exp(jnp.clip(z, LOG_SIG_MIN, LOG_SIG_MAX))
    col = jax.lax.broadcasted_iota(jnp.int32, z.shape, 1)
    out_ref[...] = jnp.where(col < action_dim, mean, std).astype(out_ref.dtype)


# --------------------------------------------------------------------------
# Parameter packing (host-side, done once)
# --------------------------------------------------------------------------
def pack_params(params, *, input_dim, hidden_dim, num_layers, action_dim,
                weight_dtype=jnp.float32):
    """Pack natural-shape params into one weight slab + one bias slab.

    params = (W_0, b_0, ..., W_{L-1}, b_{L-1}, W_mean, b_mean, W_lstd, b_lstd)
    with W_i: [feat_i, hidden], heads: [feat_L, action_dim], biases [1, out].
    The feature axis is remapped onto a zero-padded layout
        [input | pad | layer0 | pad | layer1 | pad | ...]
    so every segment boundary sits on a 128-lane multiple.
    """
    d0_pad = _round_up(max(input_dim, 1), _LANE)
    h_pad = _round_up(max(hidden_dim, 1), _LANE)
    head_pad = _round_up(max(2 * action_dim, 1), _LANE)
    feat_pad = d0_pad + num_layers * h_pad
    n_all = num_layers * h_pad + head_pad

    def pad_rows(w):
        feat, n = w.shape
        out = jnp.zeros((feat_pad, n), jnp.float32)
        take = min(feat, input_dim)
        out = out.at[:take, :].set(w[:take])
        k, j = input_dim, 0
        while k < feat:
            seg = w[k:k + hidden_dim]
            r0 = d0_pad + j * h_pad
            out = out.at[r0:r0 + seg.shape[0], :].set(seg)
            k += hidden_dim
            j += 1
        return out

    w_all = jnp.zeros((feat_pad, n_all), jnp.float32)
    b_all = jnp.zeros((1, n_all), jnp.float32)

    for i in range(num_layers):
        w, b = params[2 * i], params[2 * i + 1]
        c0 = i * h_pad
        w_all = w_all.at[:, c0:c0 + hidden_dim].set(pad_rows(w))
        b_all = b_all.at[:, c0:c0 + hidden_dim].set(b)

    # Fused head: [W_mean || W_log_std].
    w_m, b_m = params[2 * num_layers], params[2 * num_layers + 1]
    w_s, b_s = params[2 * num_layers + 2], params[2 * num_layers + 3]
    w_head = jnp.concatenate([w_m, w_s], axis=1)       # [feat_L, 2A]
    b_head = jnp.concatenate([b_m, b_s], axis=1)
    c0 = num_layers * h_pad
    w_all = w_all.at[:, c0:c0 + 2 * action_dim].set(pad_rows(w_head))
    b_all = b_all.at[:, c0:c0 + 2 * action_dim].set(b_head)

    meta = dict(input_dim=input_dim, hidden_dim=hidden_dim,
                num_layers=num_layers, action_dim=action_dim,
                input_dim_pad=d0_pad, hidden_pad=h_pad, head_pad=head_pad,
                feat_pad=feat_pad, n_all=n_all)
    # Biases stay f32 (tiny, improves bf16-path accuracy for free).
    return w_all.astype(weight_dtype), b_all, meta


# --------------------------------------------------------------------------
# Forward wrapper
# --------------------------------------------------------------------------
def densenet_policy_forward(x, w_all, b_all, meta, *, block_b=128):
    """x: [B, input_dim] f32.  Returns (mean, std), each [B, action_dim] f32."""
    B, d0 = x.shape
    assert d0 == meta["input_dim"]
    A = meta["action_dim"]
    d0_pad = meta["input_dim_pad"]
    h_pad = meta["hidden_pad"]
    head_pad = meta["head_pad"]
    feat_pad = meta["feat_pad"]
    n_all = meta["n_all"]
    L = meta["num_layers"]
    mxu_dtype = w_all.dtype

    # Batch tiling: sublane-aligned tile, capped at block_b; pad B so the grid
    # is integral.  Keeping >=2 grid steps lets the "parallel" axis shard over
    # v7x's two TensorCores and double-buffer the x-tile DMA.
    block_b = max(_SUBLANE, min(block_b, _round_up(B, _SUBLANE)))
    block_b = _round_up(block_b, _SUBLANE)
    b_padded = _round_up(B, block_b)

    x_p = jnp.zeros((b_padded, d0_pad), mxu_dtype)
    x_p = x_p.at[:B, :d0].set(x.astype(mxu_dtype))

    grid = (b_padded // block_b,)

    itemsize = jnp.dtype(mxu_dtype).itemsize
    flops = int(2 * b_padded * feat_pad * (L * h_pad + head_pad))
    transcendentals = int(b_padded * (L * h_pad + head_pad))
    bytes_accessed = int(b_padded * d0_pad * itemsize
                         + feat_pad * n_all * itemsize
                         + n_all * 4
                         + b_padded * head_pad * 4)

    vmem_needed = (2 * block_b * d0_pad * itemsize     # x tile (double buffered)
                   + 2 * feat_pad * n_all * itemsize   # weight slab
                   + 2 * _SUBLANE * n_all * 4          # bias slab
                   + 2 * block_b * head_pad * 4        # output tile
                   + block_b * feat_pad * itemsize)    # feature scratch
    vmem_limit = int(min(max(2 * vmem_needed, 8 << 20), 100 << 20))

    kernel = functools.partial(
        _densenet_policy_kernel, L, d0_pad, h_pad, head_pad, A)

    out = pl.pallas_call(
        kernel,
        out_shape=jax.ShapeDtypeStruct((b_padded, head_pad), jnp.float32),
        grid_spec=pltpu.PrefetchScalarGridSpec(
            num_scalar_prefetch=0,
            grid=grid,
            in_specs=[
                pl.BlockSpec((block_b, d0_pad), lambda i: (i, 0)),
                pl.BlockSpec((feat_pad, n_all), lambda i: (0, 0)),
                pl.BlockSpec((1, n_all), lambda i: (0, 0)),
            ],
            out_specs=pl.BlockSpec((block_b, head_pad), lambda i: (i, 0)),
            scratch_shapes=[pltpu.VMEM((block_b, feat_pad), mxu_dtype)],
        ),
        compiler_params=pltpu.CompilerParams(
            dimension_semantics=("parallel",),
            vmem_limit_bytes=vmem_limit,
        ),
        cost_estimate=pl.CostEstimate(
            flops=flops, transcendentals=transcendentals,
            bytes_accessed=bytes_accessed),
    )(x_p, w_all, b_all)

    mean = out[:B, :A]
    std = out[:B, A:2 * A]
    return mean, std


# --------------------------------------------------------------------------
# Synthetic init + pure-JAX reference (mirrors the PyTorch module)
# --------------------------------------------------------------------------
def init_params(key, input_dim, action_dim, num_layers, hidden_dim,
                init_w=0.001):
    """Weights as [in, out] (so y = x @ W + b == PyTorch x @ W.T + b)."""
    params = []
    fan_in = input_dim
    for _ in range(num_layers):
        key, kw, kb = jax.random.split(key, 3)
        bound = 1.0 / float(fan_in) ** 0.5
        w = jax.random.uniform(kw, (fan_in, hidden_dim), jnp.float32,
                               -bound, bound)
        b = jax.random.uniform(kb, (1, hidden_dim), jnp.float32,
                               -bound, bound)
        params += [w, b]
        fan_in += hidden_dim
    for _ in range(2):  # fc_mean, fc_log_std
        key, kw, kb = jax.random.split(key, 3)
        w = jax.random.uniform(kw, (fan_in, action_dim), jnp.float32,
                               -init_w, init_w)
        b = jax.random.uniform(kb, (1, action_dim), jnp.float32,
                               -init_w, init_w)
        params += [w, b]
    return tuple(params)


def reference_forward(x, params, num_layers):
    h = x
    for i in range(num_layers):
        w, b = params[2 * i], params[2 * i + 1]
        z = h @ w + b
        h = jnp.concatenate([h, z * jax.nn.sigmoid(z)], axis=-1)
    w_m, b_m = params[2 * num_layers], params[2 * num_layers + 1]
    w_s, b_s = params[2 * num_layers + 2], params[2 * num_layers + 3]
    mean = jnp.clip(h @ w_m + b_m, MEAN_MIN, MEAN_MAX)
    log_std = jnp.clip(h @ w_s + b_s, LOG_SIG_MIN, LOG_SIG_MAX)
    return mean, jnp.exp(log_std)


# TODO(synk): discrete_gripper head (nn.Linear(hidden_dim, 2)) is constructed
# by the module but never used in forward(); intentionally not implemented.

if __name__ == "__main__":
    # Small shapes consistent with the module (hidden_dim kept small for the
    # demo; the real default 256 is already a lane multiple).
    batch = 256          # 2 batch tiles of 128 -> grid=(2,), both TCs on v7x
    input_dim = 32
    action_dim = 8
    num_layers = 2
    hidden_dim = 32

    key = jax.random.PRNGKey(0)
    key, kx = jax.random.split(key)
    x = jax.random.normal(kx, (batch, input_dim), jnp.float32)
    params = init_params(key, input_dim, action_dim, num_layers, hidden_dim)

    mean_ref, std_ref = reference_forward(x, params, num_layers)

    # --- f32 MXU operands: tight correctness check ---
    w_all, b_all, meta = pack_params(
        params, input_dim=input_dim, hidden_dim=hidden_dim,
        num_layers=num_layers, action_dim=action_dim,
        weight_dtype=jnp.float32)
    mean, std = densenet_policy_forward(x, w_all, b_all, meta, block_b=128)
    mean = jax.block_until_ready(mean)
    std = jax.block_until_ready(std)
    assert mean.shape == (batch, action_dim) and std.shape == (batch, action_dim)
    assert jnp.allclose(mean, mean_ref, atol=5e-5, rtol=5e-5)
    assert jnp.allclose(std, std_ref, atol=5e-5, rtol=5e-5)

    # --- bf16 MXU operands (v6e/v7x fast path), f32 accumulation: loose check ---
    w16, b16, meta16 = pack_params(
        params, input_dim=input_dim, hidden_dim=hidden_dim,
        num_layers=num_layers, action_dim=action_dim,
        weight_dtype=jnp.bfloat16)
    mean16, std16 = densenet_policy_forward(x, w16, b16, meta16, block_b=128)
    mean16 = jax.block_until_ready(mean16)
    std16 = jax.block_until_ready(std16)
    assert jnp.allclose(mean16, mean_ref, atol=5e-2, rtol=5e-2)
    assert jnp.allclose(std16, std_ref, atol=5e-2, rtol=5e-2)

    print("KERNEL_OK")
</pallas_src>

<mosaic_0001>
module attributes {stable_mosaic.version = 11 : i64} {
  func.func @_densenet_policy_kernel(%arg0: i32, %arg1: memref<128x128xf32, #tpu.memory_space<vmem>>, %arg2: memref<384x384xf32, #tpu.memory_space<vmem>>, %arg3: memref<1x384xf32, #tpu.memory_space<vmem>>, %arg4: memref<128x128xf32, #tpu.memory_space<vmem>>, %arg5: memref<128x384xf32, #tpu.memory_space<vmem>>) attributes {dimension_semantics = [#tpu.dimension_semantics<parallel>], iteration_bounds = array<i64: 2>, scalar_prefetch = 0 : i64, scratch_operands = 1 : i64, tpu.core_type = #tpu.core_type<tc>, window_params = [{transform_indices = @transform_0, window_bounds = array<i64: 128, 128>}, {pipeline_mode = #tpu.pipeline_mode<synchronous>, transform_indices = @transform_1, window_bounds = array<i64: 384, 384>}, {pipeline_mode = #tpu.pipeline_mode<synchronous>, transform_indices = @transform_2, window_bounds = array<i64: 1, 384>}, {transform_indices = @transform_3, window_bounds = array<i64: 128, 128>}]} {
    %cst = arith.constant 0.000000e+00 : f32
    %0 = vector.broadcast %cst : f32 to vector<128x384xf32>
    %c0 = arith.constant 0 : index
    %c0_0 = arith.constant 0 : index
    %1 = vector.load %arg5[%c0, %c0_0] : memref<128x384xf32, #tpu.memory_space<vmem>>, vector<128x384xf32>
    tpu.vector_store %arg5[%c0, %c0_0], %0 {strides = array<i32>} : memref<128x384xf32, #tpu.memory_space<vmem>>, vector<128x384xf32>,
    %c0_1 = arith.constant 0 : index
    %c0_2 = arith.constant 0 : index
    %2 = vector.load %arg1[%c0_1, %c0_2] : memref<128x128xf32, #tpu.memory_space<vmem>>, vector<128x128xf32>
    %c0_3 = arith.constant 0 : index
    %c0_4 = arith.constant 0 : index
    %3 = vector.load %arg5[%c0_3, %c0_4] : memref<128x384xf32, #tpu.memory_space<vmem>>, vector<128x128xf32>
    tpu.vector_store %arg5[%c0_3, %c0_4], %2 {strides = array<i32>} : memref<128x384xf32, #tpu.memory_space<vmem>>, vector<128x128xf32>,
    %c0_5 = arith.constant 0 : index
    %c0_6 = arith.constant 0 : index
    %4 = vector.load %arg2[%c0_5, %c0_6] : memref<384x384xf32, #tpu.memory_space<vmem>>, vector<384x128xf32>
    %c0_7 = arith.constant 0 : index
    %c0_8 = arith.constant 0 : index
    %5 = vector.load %arg3[%c0_7, %c0_8] : memref<1x384xf32, #tpu.memory_space<vmem>>, vector<1x128xf32>
    %c0_9 = arith.constant 0 : index
    %c0_10 = arith.constant 0 : index
    %6 = vector.load %arg5[%c0_9, %c0_10] : memref<128x384xf32, #tpu.memory_space<vmem>>, vector<128x384xf32>
    %cst_11 = arith.constant dense<0.000000e+00> : vector<128x128xf32>
    %7 = tpu.matmul %6, %4, %cst_11 {dimension_numbers = #tpu.dot_dimension_numbers<[1], [0], [0], [1], [0, 0, 1, 1], [], []>} : vector<128x384xf32>, vector<384x128xf32>, vector<128x128xf32> -> vector<128x128xf32>
    %8 = vector.broadcast %5 : vector<1x128xf32> to vector<128x128xf32>
    %9 = arith.addf %7, %8 : vector<128x128xf32>
    %cst_12 = arith.constant 0.000000e+00 : f32
    %10 = vector.broadcast %cst_12 : f32 to vector<128x128xf32>
    %11 = arith.subf %10, %9 : vector<128x128xf32>
    %12 = math.exp %11 : vector<128x128xf32>
    %cst_13 = arith.constant 1.000000e+00 : f32
    %13 = vector.broadcast %cst_13 : f32 to vector<128x128xf32>
    %14 = arith.addf %13, %12 : vector<128x128xf32>
    %15 = tpu.reciprocal %14 : vector<128x128xf32> -> vector<128x128xf32>
    %16 = arith.mulf %9, %15 : vector<128x128xf32>
    %c0_14 = arith.constant 0 : index
    %c128 = arith.constant 128 : index
    %17 = vector.load %arg5[%c0_14, %c128] : memref<128x384xf32, #tpu.memory_space<vmem>>, vector<128x128xf32>
    tpu.vector_store %arg5[%c0_14, %c128], %16 {strides = array<i32>} : memref<128x384xf32, #tpu.memory_space<vmem>>, vector<128x128xf32>,
    %c0_15 = arith.constant 0 : index
    %c128_16 = arith.constant 128 : index
    %18 = vector.load %arg2[%c0_15, %c128_16] : memref<384x384xf32, #tpu.memory_space<vmem>>, vector<384x128xf32>
    %c0_17 = arith.constant 0 : index
    %c128_18 = arith.constant 128 : index
    %19 = vector.load %arg3[%c0_17, %c128_18] : memref<1x384xf32, #tpu.memory_space<vmem>>, vector<1x128xf32>
    %c0_19 = arith.constant 0 : index
    %c0_20 = arith.constant 0 : index
    %20 = vector.load %arg5[%c0_19, %c0_20] : memref<128x384xf32, #tpu.memory_space<vmem>>, vector<128x384xf32>
    %cst_21 = arith.constant dense<0.000000e+00> : vector<128x128xf32>
    %21 = tpu.matmul %20, %18, %cst_21 {dimension_numbers = #tpu.dot_dimension_numbers<[1], [0], [0], [1], [0, 0, 1, 1], [], []>} : vector<128x384xf32>, vector<384x128xf32>, vector<128x128xf32> -> vector<128x128xf32>
    %22 = vector.broadcast %19 : vector<1x128xf32> to vector<128x128xf32>
    %23 = arith.addf %21, %22 : vector<128x128xf32>
    %cst_22 = arith.constant 0.000000e+00 : f32
    %24 = vector.broadcast %cst_22 : f32 to vector<128x128xf32>
    %25 = arith.subf %24, %23 : vector<128x128xf32>
    %26 = math.exp %25 : vector<128x128xf32>
    %cst_23 = arith.constant 1.000000e+00 : f32
    %27 = vector.broadcast %cst_23 : f32 to vector<128x128xf32>
    %28 = arith.addf %27, %26 : vector<128x128xf32>
    %29 = tpu.reciprocal %28 : vector<128x128xf32> -> vector<128x128xf32>
    %30 = arith.mulf %23, %29 : vector<128x128xf32>
    %c0_24 = arith.constant 0 : index
    %c256 = arith.constant 256 : index
    %31 = vector.load %arg5[%c0_24, %c256] : memref<128x384xf32, #tpu.memory_space<vmem>>, vector<128x128xf32>
    tpu.vector_store %arg5[%c0_24, %c256], %30 {strides = array<i32>} : memref<128x384xf32, #tpu.memory_space<vmem>>, vector<128x128xf32>,
    %c0_25 = arith.constant 0 : index
    %c256_26 = arith.constant 256 : index
    %32 = vector.load %arg2[%c0_25, %c256_26] : memref<384x384xf32, #tpu.memory_space<vmem>>, vector<384x128xf32>
    %c0_27 = arith.constant 0 : index
    %c256_28 = arith.constant 256 : index
    %33 = vector.load %arg3[%c0_27, %c256_28] : memref<1x384xf32, #tpu.memory_space<vmem>>, vector<1x128xf32>
    %c0_29 = arith.constant 0 : index
    %c0_30 = arith.constant 0 : index
    %34 = vector.load %arg5[%c0_29, %c0_30] : memref<128x384xf32, #tpu.memory_space<vmem>>, vector<128x384xf32>
    %cst_31 = arith.constant dense<0.000000e+00> : vector<128x128xf32>
    %35 = tpu.matmul %34, %32, %cst_31 {dimension_numbers = #tpu.dot_dimension_numbers<[1], [0], [0], [1], [0, 0, 1, 1], [], []>} : vector<128x384xf32>, vector<384x128xf32>, vector<128x128xf32> -> vector<128x128xf32>
    %36 = vector.broadcast %33 : vector<1x128xf32> to vector<128x128xf32>
    %37 = arith.addf %35, %36 : vector<128x128xf32>
    %cst_32 = arith.constant -9.000000e+00 : f32
    %cst_33 = arith.constant 9.000000e+00 : f32
    %38 = vector.broadcast %cst_32 : f32 to vector<128x128xf32>
    %39 = arith.maximumf %38, %37 : vector<128x128xf32>
    %40 = vector.broadcast %cst_33 : f32 to vector<128x128xf32>
    %41 = arith.minimumf %40, %39 : vector<128x128xf32>
    %cst_34 = arith.constant -5.000000e+00 : f32
    %cst_35 = arith.constant 2.000000e+00 : f32
    %42 = vector.broadcast %cst_34 : f32 to vector<128x128xf32>
    %43 = arith.maximumf %42, %37 : vector<128x128xf32>
    %44 = vector.broadcast %cst_35 : f32 to vector<128x128xf32>
    %45 = arith.minimumf %44, %43 : vector<128x128xf32>
    %46 = math.exp %45 : vector<128x128xf32>
    %47 = tpu.iota {dimensions = array<i32: 1>} : vector<128x128xi32>
    %c8_i32 = arith.constant 8 : i32
    %48 = vector.broadcast %c8_i32 : i32 to vector<128x128xi32>
    %49 = arith.cmpi slt, %47, %48 : vector<128x128xi32>
    %50 = arith.select %49, %41, %46 : vector<128x128xi1>, vector<128x128xf32>
    %c0_36 = arith.constant 0 : index
    %c0_37 = arith.constant 0 : index
    %51 = vector.load %arg4[%c0_36, %c0_37] : memref<128x128xf32, #tpu.memory_space<vmem>>, vector<128x128xf32>
    tpu.vector_store %arg4[%c0_36, %c0_37], %50 {strides = array<i32>} : memref<128x128xf32, #tpu.memory_space<vmem>>, vector<128x128xf32>,
    return
  }
  func.func @transform_0(%arg0: i32) -> (i32, i32) {
    %c0_i32 = arith.constant 0 : i32
    %c0_i32_0 = arith.constant 0 : i32
    return %arg0, %c0_i32 : i32, i32
  }
  func.func @transform_1(%arg0: i32) -> (i32, i32) {
    %c0_i32 = arith.constant 0 : i32
    %c0_i32_0 = arith.constant 0 : i32
    %c0_i32_1 = arith.constant 0 : i32
    return %c0_i32, %c0_i32_0 : i32, i32
  }
  func.func @transform_2(%arg0: i32) -> (i32, i32) {
    %c0_i32 = arith.constant 0 : i32
    %c0_i32_0 = arith.constant 0 : i32
    %c0_i32_1 = arith.constant 0 : i32
    return %c0_i32, %c0_i32_0 : i32, i32
  }
  func.func @transform_3(%arg0: i32) -> (i32, i32) {
    %c0_i32 = arith.constant 0 : i32
    %c0_i32_0 = arith.constant 0 : i32
    return %arg0, %c0_i32 : i32, i32
  }
}

</mosaic_0001>

<llo_original>
// kernel: tpu_custom_call.1
$region0: #{tpu_custom_call.1}
  #allocation0 [shape = 'u32[]', space=smem, size = 0x4, offset = 0x4, fixed_abs, tag = 'smem constant byte address 0x4 - core index']
  #allocation1 [shape = 'u32[144,128]{1,0:T(1,128)}', space=vmem, size = 0x12000, scoped, tag = 'internal scratch']
  #allocation2 [shape = 'f32[128,384]{1,0:T(8,128)}', space=vmem, size = 0x30000, scoped, tag = 'scratch operand']
  %s0 = inlined_call_operand.hbm [shape: f32[256,128], index: 0, kind: input, shape index: {}]
  %s1 = inlined_call_operand.hbm [shape: f32[384,384], index: 1, kind: input, shape index: {}]
  %s2 = inlined_call_operand.vmem [shape: f32[1,384], index: 2, kind: input, shape index: {}]
  %s3 = inlined_call_operand.hbm [shape: f32[256,128], index: 3, kind: output, shape index: {}]
  %s4 = sld [smem:[#allocation0]]
  $region53: #{tpu_custom_call.1} parent=0
    _
  %s6 = ssub.s32 1, %s4
  %s7 = scalar_select 0, %s6, %s4
  $region1: #{tpu_custom_call.1} parent=0
    #allocation3 [shape = 'u8[131072]{0}', space=vmem, size = 0x20000, scoped, tag = 'input window, operand 0']
    #allocation4 [shape = 's32[2]{0}', space=sflag, size = 0x8, scoped, tag = 'scoped memory for tpu_custom_call.1']
    #allocation5 [shape = 's32[2]{0}', space=sflag, size = 0x8, scoped, tag = 'scoped memory for tpu_custom_call.1']
    #allocation6 [shape = 'u8[589824]{0}', space=vmem, size = 0x90000, scoped, tag = 'input window, operand 1, single buffered']
    #allocation7 [shape = 's32[1]{0}', space=sflag, size = 0x4, scoped, tag = 'scoped memory for tpu_custom_call.1']
    #allocation8 [shape = 'u8[131072]{0}', space=vmem, size = 0x20000, scoped, tag = 'output window, operand 0']
    %8 = vsyncpa [#allocation4], 0
    %s9 = scalar_lea.sflag [#allocation4], 1
    %10 = vsyncpa %s9, 0
    %11 = vsyncpa [#allocation7], 0
    %12 = vsyncpa [#allocation5], 0
    %s13 = scalar_lea.sflag [#allocation5], 1
    %14 = vsyncpa %s13, 0
    loop: start=0, step=1, limit=4
    $region2: #{tpu_custom_call.1} parent=1 // loop_pre_header
      _
    $region3: #{tpu_custom_call.1} parent=1 // loop_header
      %s16 = sphi 0, %s20
      %p17 = scmp.ge.s32.totalorder %s16, 4
      %s26 = sphi 0, %s28
      %s29 = sphi 0, %s26
      %s30 = sphi 0, %s29
      %s46 = sphi 0, %s30
      %s50 = sphi 0, %s50
      %s52 = sphi 0, %s50
      %s53 = sphi 0, %s52
      %s67 = sphi 0, %s53
      %s71 = sphi 0, %s71
      %s73 = sphi 0, %s71
      %s74 = sphi 0, %s73
      %s88 = sphi 0, %s74
      %s94 = sphi 0, %s96
      %s97 = sphi 0, %s94
      %s98 = sphi 0, %s97
      %s114 = sphi 0, %s98
    $region4: #{tpu_custom_call.1} parent=1 // loop_header_branch
      %19 = sbr.rel (%p17) target = $region8
    $region5: #{tpu_custom_call.1} parent=1 // loop_body
      %s21 = ssub.s32 %s16, 1
      %s22 = ssub.s32 %s16, 2
      %s23 = sadd.s32 %s16, 1
      %s24 = ssub.s32 %s16, %s23
      %p25 = scmp.eq.s32.totalorder %s24, 0
      %s27 = sadd.s32 %s26, 1
      %s28 = scalar_select %p25, %s26, %s27
      %p31 = pneg %p25
      %p32 = scmp.eq.s32.totalorder %s16, 1
      %p33 = por %p31, %p32
      %p34 = scmp.ne.s32.totalorder %s26, %s29
      %p35 = scmp.eq.s32.totalorder %s16, 0
      %p36 = por %p34, %p35
      %p37 = scmp.ne.s32.totalorder %s26, %s29
      %p38 = scmp.eq.s32.totalorder %s21, 1
      %p39 = por %p37, %p38
      %p40 = scmp.ne.s32.totalorder %s29, %s30
      %p41 = scmp.eq.s32.totalorder %s21, 0
      %p42 = por %p40, %p41
      %p43 = scmp.ne.s32.totalorder %s29, %s30
      %p44 = scmp.eq.s32.totalorder %s22, 1
      %p45 = por %p43, %p44
      %p47 = scmp.ne.s32.totalorder %s30, %s46
      %p48 = scmp.eq.s32.totalorder %s22, 0
      %p49 = por %p47, %p48
      %s51 = sadd.s32 %s50, 1
      %p54 = scmp.eq.s32.totalorder %s16, 1
      %p55 = scmp.ne.s32.totalorder %s50, %s52
      %p56 = scmp.eq.s32.totalorder %s16, 0
      %p57 = por %p55, %p56
      %p58 = scmp.ne.s32.totalorder %s50, %s52
      %p59 = scmp.eq.s32.totalorder %s21, 1
      %p60 = por %p58, %p59
      %p61 = scmp.ne.s32.totalorder %s52, %s53
      %p62 = scmp.eq.s32.totalorder %s21, 0
      %p63 = por %p61, %p62
      %p64 = scmp.ne.s32.totalorder %s52, %s53
      %p65 = scmp.eq.s32.totalorder %s22, 1
      %p66 = por %p64, %p65
      %p68 = scmp.ne.s32.totalorder %s53, %s67
      %p69 = scmp.eq.s32.totalorder %s22, 0
      %p70 = por %p68, %p69
      %s72 = sadd.s32 %s71, 1
      %p75 = scmp.eq.s32.totalorder %s16, 1
      %p76 = scmp.ne.s32.totalorder %s71, %s73
      %p77 = scmp.eq.s32.totalorder %s16, 0
      %p78 = por %p76, %p77
      %p79 = scmp.ne.s32.totalorder %s71, %s73
      %p80 = scmp.eq.s32.totalorder %s21, 1
      %p81 = por %p79, %p80
      %p82 = scmp.ne.s32.totalorder %s73, %s74
      %p83 = scmp.eq.s32.totalorder %s21, 0
      %p84 = por %p82, %p83
      %p85 = scmp.ne.s32.totalorder %s73, %s74
      %p86 = scmp.eq.s32.totalorder %s22, 1
      %p87 = por %p85, %p86
      %p89 = scmp.ne.s32.totalorder %s74, %s88
      %p90 = scmp.eq.s32.totalorder %s22, 0
      %p91 = por %p89, %p90
      %s92 = ssub.s32 %s16, %s23
      %p93 = scmp.eq.s32.totalorder %s92, 0
      %s95 = sadd.s32 %s94, 1
      %s96 = scalar_select %p93, %s94, %s95
      %p99 = pneg %p93
      %p100 = scmp.eq.s32.totalorder %s16, 1
      %p101 = por %p99, %p100
      %p102 = scmp.ne.s32.totalorder %s94, %s97
      %p103 = scmp.eq.s32.totalorder %s16, 0
      %p104 = por %p102, %p103
      %p105 = scmp.ne.s32.totalorder %s94, %s97
      %p106 = scmp.eq.s32.totalorder %s21, 1
      %p107 = por %p105, %p106
      %p108 = scmp.ne.s32.totalorder %s97, %s98
      %p109 = scmp.eq.s32.totalorder %s21, 0
      %p110 = por %p108, %p109
      %p111 = scmp.ne.s32.totalorder %s97, %s98
      %p112 = scmp.eq.s32.totalorder %s22, 1
      %p113 = por %p111, %p112
      %p115 = scmp.ne.s32.totalorder %s98, %s114
      %p116 = scmp.eq.s32.totalorder %s22, 0
      %p117 = por %p115, %p116
      %p118 = scmp.le.s32.totalorder 1, %s16
      %p119 = scmp.lt.s32.totalorder %s16, 3
      %p120 = pnand %p118, %p119
      %p121 = pneg %p120
      // Predicated region
      $region9: #{tpu_custom_call.1} parent=5 // pred_check
        _
      $region10: #{tpu_custom_call.1} parent=5 // pred_check_branch
        %123 = sbr.rel (%p120) target = $region12
      $region11: #{tpu_custom_call.1} parent=5 // pred_region
        %s124 = ssub.s32 %s16, 1
        // Predicated region
        $region13: #{tpu_custom_call.1} parent=11 // pred_check
          %p125 = pneg %p63
        $region14: #{tpu_custom_call.1} parent=11 // pred_check_branch
          %127 = sbr.rel (%p125) target = $region16
        $region15: #{tpu_custom_call.1} parent=11 // pred_region
          %s129 = ssub.s32 18432, 18432
          %130 = vsyncadd [#allocation7], %s129
          %s131 = sshll.u32 [#allocation6], 4
          %s132 = int_to_ptr.vmem [resolvable:$true] %s131
          %137 = dma.hbm_to_vmem [thread:$0]  %s1, 18432, %s132, [#allocation7], 384, 384, 24
        $region16: #{tpu_custom_call.1} parent=11 // pred_fallthru
          _
        // Predicated region
        $region17: #{tpu_custom_call.1} parent=11 // pred_check
          %p138 = pneg %p84
        $region18: #{tpu_custom_call.1} parent=11 // pred_check_branch
          %140 = sbr.rel (%p138) target = $region20
        $region19: #{tpu_custom_call.1} parent=11 // pred_region
          _
        $region20: #{tpu_custom_call.1} parent=11 // pred_fallthru
          _
      $region12: #{tpu_custom_call.1} parent=5 // pred_fallthru
        _
      %p141 = scmp.lt.s32.totalorder %s16, 2
      // Predicated region
      $region21: #{tpu_custom_call.1} parent=5 // pred_check
        %p142 = pneg %p141
      $region22: #{tpu_custom_call.1} parent=5 // pred_check_branch
        %144 = sbr.rel (%p142) target = $region24
      $region23: #{tpu_custom_call.1} parent=5 // pred_region
        // Predicated region
        $region25: #{tpu_custom_call.1} parent=23 // pred_check
          %p145 = pneg %p36
        $region26: #{tpu_custom_call.1} parent=23 // pred_check_branch
          %147 = sbr.rel (%p145) target = $region28
        $region27: #{tpu_custom_call.1} parent=23 // pred_region
          %s148 = sand.u32 %s26, 1
          %s149 = scalar_lea.sflag [#allocation4], %s148
          %s150 = sand.u32 %s26, 1
          %s151 = smul.addr %s150, 128
          %s152 = scalar_lea.vmem [#allocation3], %s151
          %s153 = smul.u32 16, %s16
          %s155 = ssub.s32 2048, 2048
          %156 = vsyncadd %s149, %s155
          %s157 = smul.addr %s153, 128
          %s158 = scalar_lea.hbm %s0, %s157
          %s159 = sshll.u32 %s152, 4
          %s160 = int_to_ptr.vmem [resolvable:$true] %s159
          %165 = dma.hbm_to_vmem [thread:$0]  %s158, 2048, %s160, %s149, 128, 128, 8
        $region28: #{tpu_custom_call.1} parent=23 // pred_fallthru
          _
      $region24: #{tpu_custom_call.1} parent=5 // pred_fallthru
        _
      %p166 = scmp.le.s32.totalorder 1, %s16
      %p167 = scmp.lt.s32.totalorder %s16, 3
      %p168 = pnand %p166, %p167
      %p169 = pneg %p168
      // Predicated region
      $region29: #{tpu_custom_call.1} parent=5 // pred_check
        _
      $region30: #{tpu_custom_call.1} parent=5 // pred_check_branch
        %171 = sbr.rel (%p168) target = $region32
      $region31: #{tpu_custom_call.1} parent=5 // pred_region
        %s172 = ssub.s32 %s16, 1
        %s173 = sand.u32 %s29, 1
        %s174 = scalar_lea.sflag [#allocation4], %s173
        %s175 = sand.u32 %s29, 1
        %s176 = smul.addr %s175, 128
        %s177 = scalar_lea.vmem [#allocation3], %s176
        // Predicated region
        $region33: #{tpu_custom_call.1} parent=31 // pred_check
          %p178 = pneg %p42
        $region34: #{tpu_custom_call.1} parent=31 // pred_check_branch
          %180 = sbr.rel (%p178) target = $region36
        $region35: #{tpu_custom_call.1} parent=31 // pred_region
          %181 = dma.done %s174, 2048
        $region36: #{tpu_custom_call.1} parent=31 // pred_fallthru
          _
        // Predicated region
        $region37: #{tpu_custom_call.1} parent=31 // pred_check
          %p182 = pneg %p63
        $region38: #{tpu_custom_call.1} parent=31 // pred_check_branch
          %184 = sbr.rel (%p182) target = $region40
        $region39: #{tpu_custom_call.1} parent=31 // pred_region
          %185 = dma.done [#allocation7], 18432
        $region40: #{tpu_custom_call.1} parent=31 // pred_fallthru
          _
        %s186 = sand.u32 %s29, 1
        %s187 = scalar_lea.sflag [#allocation4], %s186
        %s188 = sand.u32 %s29, 1
        %s189 = smul.addr %s188, 128
        %s190 = scalar_lea.vmem [#allocation3], %s189
        %p191 = pneg %p42
        %p192 = pneg %p39
        %p193 = pneg %p63
        %p194 = pneg %p60
        %p195 = pneg %p84
        %p196 = pneg %p81
        %p197 = pneg %p110
        %p198 = pneg %p107
        %s199 = sand.u32 %s97, 1
        %s200 = scalar_lea.sflag [#allocation5], %s199
        %s201 = sand.u32 %s97, 1
        %s202 = smul.addr %s201, 128
        %s203 = scalar_lea.vmem [#allocation8], %s202
        %s204 = smul.u32 16, %s21
        %s205 = smul.u32 16, %s21
        %206 = vst [vmem:[#allocation2] sm:$0xff] 0.0
        %207 = vst [vmem:[#allocation2 + $0x8] sm:$0xff] 0.0
        %208 = vst [vmem:[#allocation2 + $0x10] sm:$0xff] 0.0
        %209 = vst [vmem:[#allocation2 + $0x18] sm:$0xff] 0.0
        %210 = vst [vmem:[#allocation2 + $0x20] sm:$0xff] 0.0
        %211 = vst [vmem:[#allocation2 + $0x28] sm:$0xff] 0.0
        %212 = vst [vmem:[#allocation2 + $0x30] sm:$0xff] 0.0
        %213 = vst [vmem:[#allocation2 + $0x38] sm:$0xff] 0.0
        %214 = vst [vmem:[#allocation2 + $0x40] sm:$0xff] 0.0
        %215 = vst [vmem:[#allocation2 + $0x48] sm:$0xff] 0.0
        %216 = vst [vmem:[#allocation2 + $0x50] sm:$0xff] 0.0
        %217 = vst [vmem:[#allocation2 + $0x58] sm:$0xff] 0.0
        %218 = vst [vmem:[#allocation2 + $0x60] sm:$0xff] 0.0
        %219 = vst [vmem:[#allocation2 + $0x68] sm:$0xff] 0.0
        %220 = vst [vmem:[#allocation2 + $0x70] sm:$0xff] 0.0
        %221 = vst [vmem:[#allocation2 + $0x78] sm:$0xff] 0.0
        %222 = vst [vmem:[#allocation2 + $0x80] sm:$0xff] 0.0
        %223 = vst [vmem:[#allocation2 + $0x88] sm:$0xff] 0.0
        %224 = vst [vmem:[#allocation2 + $0x90] sm:$0xff] 0.0
        %225 = vst [vmem:[#allocation2 + $0x98] sm:$0xff] 0.0
        %226 = vst [vmem:[#allocation2 + $0xa0] sm:$0xff] 0.0
        %227 = vst [vmem:[#allocation2 + $0xa8] sm:$0xff] 0.0
        %228 = vst [vmem:[#allocation2 + $0xb0] sm:$0xff] 0.0
        %229 = vst [vmem:[#allocation2 + $0xb8] sm:$0xff] 0.0
        %230 = vst [vmem:[#allocation2 + $0xc0] sm:$0xff] 0.0
        %231 = vst [vmem:[#allocation2 + $0xc8] sm:$0xff] 0.0
        %232 = vst [vmem:[#allocation2 + $0xd0] sm:$0xff] 0.0
        %233 = vst [vmem:[#allocation2 + $0xd8] sm:$0xff] 0.0
        %234 = vst [vmem:[#allocation2 + $0xe0] sm:$0xff] 0.0
        %235 = vst [vmem:[#allocation2 + $0xe8] sm:$0xff] 0.0
        %236 = vst [vmem:[#allocation2 + $0xf0] sm:$0xff] 0.0
        %237 = vst [vmem:[#allocation2 + $0xf8] sm:$0xff] 0.0
        %238 = vst [vmem:[#allocation2 + $0x100] sm:$0xff] 0.0
        %239 = vst [vmem:[#allocation2 + $0x108] sm:$0xff] 0.0
        %240 = vst [vmem:[#allocation2 + $0x110] sm:$0xff] 0.0
        %241 = vst [vmem:[#allocation2 + $0x118] sm:$0xff] 0.0
        %242 = vst [vmem:[#allocation2 + $0x120] sm:$0xff] 0.0
        %243 = vst [vmem:[#allocation2 + $0x128] sm:$0xff] 0.0
        %244 = vst [vmem:[#allocation2 + $0x130] sm:$0xff] 0.0
        %245 = vst [vmem:[#allocation2 + $0x138] sm:$0xff] 0.0
        %246 = vst [vmem:[#allocation2 + $0x140] sm:$0xff] 0.0
        %247 = vst [vmem:[#allocation2 + $0x148] sm:$0xff] 0.0
        %248 = vst [vmem:[#allocation2 + $0x150] sm:$0xff] 0.0
        %249 = vst [vmem:[#allocation2 + $0x158] sm:$0xff] 0.0
        %250 = vst [vmem:[#allocation2 + $0x160] sm:$0xff] 0.0
        %251 = vst [vmem:[#allocation2 + $0x168] sm:$0xff] 0.0
        %252 = vst [vmem:[#allocation2 + $0x170] sm:$0xff] 0.0
        %253 = vst [vmem:[#allocation2 + $0x178] sm:$0xff] 0.0
        %v254 = vld [vmem:[%s177] sm:$0xff]
        %v255 = vld [vmem:[%s177 + $0x8] sm:$0xff]
        %v256 = vld [vmem:[%s177 + $0x10] sm:$0xff]
        %v257 = vld [vmem:[%s177 + $0x18] sm:$0xff]
        %v258 = vld [vmem:[%s177 + $0x20] sm:$0xff]
        %v259 = vld [vmem:[%s177 + $0x28] sm:$0xff]
        %v260 = vld [vmem:[%s177 + $0x30] sm:$0xff]
        %v261 = vld [vmem:[%s177 + $0x38] sm:$0xff]
        %v262 = vld [vmem:[%s177 + $0x40] sm:$0xff]
        %v263 = vld [vmem:[%s177 + $0x48] sm:$0xff]
        %v264 = vld [vmem:[%s177 + $0x50] sm:$0xff]
        %v265 = vld [vmem:[%s177 + $0x58] sm:$0xff]
        %v266 = vld [vmem:[%s177 + $0x60] sm:$0xff]
        %v267 = vld [vmem:[%s177 + $0x68] sm:$0xff]
        %v268 = vld [vmem:[%s177 + $0x70] sm:$0xff]
        %v269 = vld [vmem:[%s177 + $0x78] sm:$0xff]
        %270 = vst [vmem:[#allocation2] sm:$0xff] %v254
        %271 = vst [vmem:[#allocation2 + $0x18] sm:$0xff] %v255
        %272 = vst [vmem:[#allocation2 + $0x30] sm:$0xff] %v256
        %273 = vst [vmem:[#allocation2 + $0x48] sm:$0xff] %v257
        %274 = vst [vmem:[#allocation2 + $0x60] sm:$0xff] %v258
        %275 = vst [vmem:[#allocation2 + $0x78] sm:$0xff] %v259
        %276 = vst [vmem:[#allocation2 + $0x90] sm:$0xff] %v260
        %277 = vst [vmem:[#allocation2 + $0xa8] sm:$0xff] %v261
        %278 = vst [vmem:[#allocation2 + $0xc0] sm:$0xff] %v262
        %279 = vst [vmem:[#allocation2 + $0xd8] sm:$0xff] %v263
        %280 = vst [vmem:[#allocation2 + $0xf0] sm:$0xff] %v264
        %281 = vst [vmem:[#allocation2 + $0x108] sm:$0xff] %v265
        %282 = vst [vmem:[#allocation2 + $0x120] sm:$0xff] %v266
        %283 = vst [vmem:[#allocation2 + $0x138] sm:$0xff] %v267
        %284 = vst [vmem:[#allocation2 + $0x150] sm:$0xff] %v268
        %285 = vst [vmem:[#allocation2 + $0x168] sm:$0xff] %v269
        %v286 = vld [vmem:[#allocation6] sm:$0xff]
        %v287 = vld [vmem:[#allocation6 + $0x18] sm:$0xff]
        %v288 = vld [vmem:[#allocation6 + $0x30] sm:$0xff]
        %v289 = vld [vmem:[#allocation6 + $0x48] sm:$0xff]
        %v290 = vld [vmem:[#allocation6 + $0x60] sm:$0xff]
        %v291 = vld [vmem:[#allocation6 + $0x78] sm:$0xff]
        %v292 = vld [vmem:[#allocation6 + $0x90] sm:$0xff]
        %v293 = vld [vmem:[#allocation6 + $0xa8] sm:$0xff]
        %v294 = vld [vmem:[#allocation6 + $0xc0] sm:$0xff]
        %v295 = vld [vmem:[#allocation6 + $0xd8] sm:$0xff]
        %v296 = vld [vmem:[#allocation6 + $0xf0] sm:$0xff]
        %v297 = vld [vmem:[#allocation6 + $0x108] sm:$0xff]
        %v298 = vld [vmem:[#allocation6 + $0x120] sm:$0xff]
        %v299 = vld [vmem:[#allocation6 + $0x138] sm:$0xff]
        %v300 = vld [vmem:[#allocation6 + $0x150] sm:$0xff]
        %v301 = vld [vmem:[#allocation6 + $0x168] sm:$0xff]
        %v302 = vld [vmem:[#allocation6 + $0x180] sm:$0xff]
        %v303 = vld [vmem:[#allocation6 + $0x198] sm:$0xff]
        %v304 = vld [vmem:[#allocation6 + $0x1b0] sm:$0xff]
        %v305 = vld [vmem:[#allocation6 + $0x1c8] sm:$0xff]
        %v306 = vld [vmem:[#allocation6 + $0x1e0] sm:$0xff]
        %v307 = vld [vmem:[#allocation6 + $0x1f8] sm:$0xff]
        %v308 = vld [vmem:[#allocation6 + $0x210] sm:$0xff]
        %v309 = vld [vmem:[#allocation6 + $0x228] sm:$0xff]
        %v310 = vld [vmem:[#allocation6 + $0x240] sm:$0xff]
        %v311 = vld [vmem:[#allocation6 + $0x258] sm:$0xff]
        %v312 = vld [vmem:[#allocation6 + $0x270] sm:$0xff]
        %v313 = vld [vmem:[#allocation6 + $0x288] sm:$0xff]
        %v314 = vld [vmem:[#allocation6 + $0x2a0] sm:$0xff]
        %v315 = vld [vmem:[#allocation6 + $0x2b8] sm:$0xff]
        %v316 = vld [vmem:[#allocation6 + $0x2d0] sm:$0xff]
        %v317 = vld [vmem:[#allocation6 + $0x2e8] sm:$0xff]
        %v318 = vld [vmem:[#allocation6 + $0x300] sm:$0xff]
        %v319 = vld [vmem:[#allocation6 + $0x318] sm:$0xff]
        %v320 = vld [vmem:[#allocation6 + $0x330] sm:$0xff]
        %v321 = vld [vmem:[#allocation6 + $0x348] sm:$0xff]
        %v322 = vld [vmem:[#allocation6 + $0x360] sm:$0xff]
        %v323 = vld [vmem:[#allocation6 + $0x378] sm:$0xff]
        %v324 = vld [vmem:[#allocation6 + $0x390] sm:$0xff]
        %v325 = vld [vmem:[#allocation6 + $0x3a8] sm:$0xff]
        %v326 = vld [vmem:[#allocation6 + $0x3c0] sm:$0xff]
        %v327 = vld [vmem:[#allocation6 + $0x3d8] sm:$0xff]
        %v328 = vld [vmem:[#allocation6 + $0x3f0] sm:$0xff]
        %v329 = vld [vmem:[#allocation6 + $0x408] sm:$0xff]
        %v330 = vld [vmem:[#allocation6 + $0x420] sm:$0xff]
        %v331 = vld [vmem:[#allocation6 + $0x438] sm:$0xff]
        %v332 = vld [vmem:[#allocation6 + $0x450] sm:$0xff]
        %v333 = vld [vmem:[#allocation6 + $0x468] sm:$0xff]
        %v334 = vld [vmem:[%s2] sm:$0x1]
        %v335 = vld [vmem:[#allocation2] sm:$0xff]
        %v336 = vld [vmem:[#allocation2 + $0x8] sm:$0xff]
        %v337 = vld [vmem:[#allocation2 + $0x10] sm:$0xff]
        %v338 = vld [vmem:[#allocation2 + $0x18] sm:$0xff]
        %v339 = vld [vmem:[#allocation2 + $0x20] sm:$0xff]
        %v340 = vld [vmem:[#allocation2 + $0x28] sm:$0xff]
        %v341 = vld [vmem:[#allocation2 + $0x30] sm:$0xff]
        %v342 = vld [vmem:[#allocation2 + $0x38] sm:$0xff]
        %v343 = vld [vmem:[#allocation2 + $0x40] sm:$0xff]
        %v344 = vld [vmem:[#allocation2 + $0x48] sm:$0xff]
        %v345 = vld [vmem:[#allocation2 + $0x50] sm:$0xff]
        %v346 = vld [vmem:[#allocation2 + $0x58] sm:$0xff]
        %v347 = vld [vmem:[#allocation2 + $0x60] sm:$0xff]
        %v348 = vld [vmem:[#allocation2 + $0x68] sm:$0xff]
        %v349 = vld [vmem:[#allocation2 + $0x70] sm:$0xff]
        %v350 = vld [vmem:[#allocation2 + $0x78] sm:$0xff]
        %v351 = vld [vmem:[#allocation2 + $0x80] sm:$0xff]
        %v352 = vld [vmem:[#allocation2 + $0x88] sm:$0xff]
        %v353 = vld [vmem:[#allocation2 + $0x90] sm:$0xff]
        %v354 = vld [vmem:[#allocation2 + $0x98] sm:$0xff]
        %v355 = vld [vmem:[#allocation2 + $0xa0] sm:$0xff]
        %v356 = vld [vmem:[#allocation2 + $0xa8] sm:$0xff]
        %v357 = vld [vmem:[#allocation2 + $0xb0] sm:$0xff]
        %v358 = vld [vmem:[#allocation2 + $0xb8] sm:$0xff]
        %v359 = vld [vmem:[#allocation2 + $0xc0] sm:$0xff]
        %v360 = vld [vmem:[#allocation2 + $0xc8] sm:$0xff]
        %v361 = vld [vmem:[#allocation2 + $0xd0] sm:$0xff]
        %v362 = vld [vmem:[#allocation2 + $0xd8] sm:$0xff]
        %v363 = vld [vmem:[#allocation2 + $0xe0] sm:$0xff]
        %v364 = vld [vmem:[#allocation2 + $0xe8] sm:$0xff]
        %v365 = vld [vmem:[#allocation2 + $0xf0] sm:$0xff]
        %v366 = vld [vmem:[#allocation2 + $0xf8] sm:$0xff]
        %v367 = vld [vmem:[#allocation2 + $0x100] sm:$0xff]
        %v368 = vld [vmem:[#allocation2 + $0x108] sm:$0xff]
        %v369 = vld [vmem:[#allocation2 + $0x110] sm:$0xff]
        %v370 = vld [vmem:[#allocation2 + $0x118] sm:$0xff]
        %v371 = vld [vmem:[#allocation2 + $0x120] sm:$0xff]
        %v372 = vld [vmem:[#allocation2 + $0x128] sm:$0xff]
        %v373 = vld [vmem:[#allocation2 + $0x130] sm:$0xff]
        %v374 = vld [vmem:[#allocation2 + $0x138] sm:$0xff]
        %v375 = vld [vmem:[#allocation2 + $0x140] sm:$0xff]
        %v376 = vld [vmem:[#allocation2 + $0x148] sm:$0xff]
        %v377 = vld [vmem:[#allocation2 + $0x150] sm:$0xff]
        %v378 = vld [vmem:[#allocation2 + $0x158] sm:$0xff]
        %v379 = vld [vmem:[#allocation2 + $0x160] sm:$0xff]
        %v380 = vld [vmem:[#allocation2 + $0x168] sm:$0xff]
        %v381 = vld [vmem:[#allocation2 + $0x170] sm:$0xff]
        %v382 = vld [vmem:[#allocation2 + $0x178] sm:$0xff]
        %v384 = vlaneseq
        %v385 = vshrl.u32 %v384, 7
        %v386 = vsub.s32 0, %v385
        %v387 = vrot.slane %v334, %v386
        %389 = vmatprep.subr.mxu0 0.0
        %390 = vmatpush1.msra.mxu0 %v286
        %391 = vmatprep.subr.mxu0 0.0
        %392 = vmatpush1.msra.mxu0 %v287
        %393 = vmatprep.subr.mxu0 0.0
        %394 = vmatpush1.msra.mxu0 %v288
        %395 = vmatprep.subr.mxu0 0.0
        %396 = vmatpush1.msra.mxu0 %v289
        %397 = vmatprep.subr.mxu0 0.0
        %398 = vmatpush1.msra.mxu0 %v290
        %399 = vmatprep.subr.mxu0 0.0
        %400 = vmatpush1.msra.mxu0 %v291
        %401 = vmatprep.subr.mxu0 0.0
        %402 = vmatpush1.msra.mxu0 %v292
        %403 = vmatprep.subr.mxu0 0.0
        %404 = vmatpush1.msra.mxu0 %v293
        %405 = vmatprep.subr.mxu0 0.0
        %406 = vmatpush1.msra.mxu0 %v294
        %407 = vmatprep.subr.mxu0 0.0
        %408 = vmatpush1.msra.mxu0 %v295
        %409 = vmatprep.subr.mxu0 0.0
        %410 = vmatpush1.msra.mxu0 %v296
        %411 = vmatprep.subr.mxu0 0.0
        %412 = vmatpush1.msra.mxu0 %v297
        %413 = vmatprep.subr.mxu0 0.0
        %414 = vmatpush1.msra.mxu0 %v298
        %415 = vmatprep.subr.mxu0 0.0
        %416 = vmatpush1.msra.mxu0 %v299
        %417 = vmatprep.subr.mxu0 0.0
        %418 = vmatpush1.msra.mxu0 %v300
        %419 = vmatprep.subr.mxu0 0.0
        %420 = vmatpush1.msra.mxu0 %v301
        %421 = vmatprep.subr.mxu0 0.0
        %422 = vmatpush1.msra.mxu0 %v302
        %423 = vmatprep.subr.mxu0 0.0
        %424 = vmatpush1.msra.mxu0 %v303
        %425 = vmatprep.subr.mxu0 0.0
        %426 = vmatpush1.msra.mxu0 %v304
        %427 = vmatprep.subr.mxu0 0.0
        %428 = vmatpush1.msra.mxu0 %v305
        %429 = vmatprep.subr.mxu0 0.0
        %430 = vmatpush1.msra.mxu0 %v306
        %431 = vmatprep.subr.mxu0 0.0
        %432 = vmatpush1.msra.mxu0 %v307
        %433 = vmatprep.subr.mxu0 0.0
        %434 = vmatpush1.msra.mxu0 %v308
        %435 = vmatprep.subr.mxu0 0.0
        %436 = vmatpush1.msra.mxu0 %v309
        %437 = vmatprep.subr.mxu0 0.0
        %438 = vmatpush1.msra.mxu0 %v310
        %439 = vmatprep.subr.mxu0 0.0
        %440 = vmatpush1.msra.mxu0 %v311
        %441 = vmatprep.subr.mxu0 0.0
        %442 = vmatpush1.msra.mxu0 %v312
        %443 = vmatprep.subr.mxu0 0.0
        %444 = vmatpush1.msra.mxu0 %v313
        %445 = vmatprep.subr.mxu0 0.0
        %446 = vmatpush1.msra.mxu0 %v314
        %447 = vmatprep.subr.mxu0 0.0
        %448 = vmatpush1.msra.mxu0 %v315
        %449 = vmatprep.subr.mxu0 0.0
        %450 = vmatpush1.msra.mxu0 %v316
        %451 = vmatprep.subr.mxu0 0.0
        %452 = vmatpush1.msra.mxu0 %v317
        %453 = vmatprep.mubr.f32.mxu0 %v336
        %454 = vmatmul.mubr.f32.gmra.mrb[0].mxu0 %v335
        %v455 = vpop.f32.mrb[0].mxu0
        %v456 = vadd.f32 %v387, %v455
        %v457 = vpop.f32.mrb[0].mxu0
        %458 = vmatprep.mubr.f32.mxu0 %v339
        %459 = vmatmul.mubr.f32.gmra.mrb[0].mxu0 %v338
        %v460 = vpop.f32.mrb[0].mxu0
        %v461 = vadd.f32 %v387, %v460
        %v462 = vpop.f32.mrb[0].mxu0
        %463 = vmatprep.mubr.f32.mxu0 %v342
        %464 = vmatmul.mubr.f32.gmra.mrb[0].mxu0 %v341
        %v465 = vpop.f32.mrb[0].mxu0
        %v466 = vadd.f32 %v387, %v465
        %v467 = vpop.f32.mrb[0].mxu0
        %468 = vmatprep.mubr.f32.mxu0 %v345
        %469 = vmatmul.mubr.f32.gmra.mrb[0].mxu0 %v344
        %v470 = vpop.f32.mrb[0].mxu0
        %v471 = vadd.f32 %v387, %v470
        %v472 = vpop.f32.mrb[0].mxu0
        %473 = vmatprep.mubr.f32.mxu0 %v348
        %474 = vmatmul.mubr.f32.gmra.mrb[0].mxu0 %v347
        %v475 = vpop.f32.mrb[0].mxu0
        %v476 = vadd.f32 %v387, %v475
        %v477 = vpop.f32.mrb[0].mxu0
        %478 = vmatprep.mubr.f32.mxu0 %v351
        %479 = vmatmul.mubr.f32.gmra.mrb[0].mxu0 %v350
        %v480 = vpop.f32.mrb[0].mxu0
        %v481 = vadd.f32 %v387, %v480
        %v482 = vpop.f32.mrb[0].mxu0
        %483 = vmatprep.mubr.f32.mxu0 %v354
        %484 = vmatmul.mubr.f32.gmra.mrb[0].mxu0 %v353
        %v485 = vpop.f32.mrb[0].mxu0
        %v486 = vadd.f32 %v387, %v485
        %v487 = vpop.f32.mrb[0].mxu0
        %488 = vmatprep.mubr.f32.mxu0 %v357
        %489 = vmatmul.mubr.f32.gmra.mrb[0].mxu0 %v356
        %v490 = vpop.f32.mrb[0].mxu0
        %v491 = vadd.f32 %v387, %v490
        %v492 = vpop.f32.mrb[0].mxu0
        %493 = vmatprep.mubr.f32.mxu0 %v360
        %494 = vmatmul.mubr.f32.gmra.mrb[0].mxu0 %v359
        %v495 = vpop.f32.mrb[0].mxu0
        %v496 = vadd.f32 %v387, %v495
        %v497 = vpop.f32.mrb[0].mxu0
        %498 = vmatprep.mubr.f32.mxu0 %v363
        %499 = vmatmul.mubr.f32.gmra.mrb[0].mxu0 %v362
        %v500 = vpop.f32.mrb[0].mxu0
        %v501 = vadd.f32 %v387, %v500
        %v502 = vpop.f32.mrb[0].mxu0
        %503 = vmatprep.mubr.f32.mxu0 %v366
        %504 = vmatmul.mubr.f32.gmra.mrb[0].mxu0 %v365
        %v505 = vpop.f32.mrb[0].mxu0
        %v506 = vadd.f32 %v387, %v505
        %v507 = vpop.f32.mrb[0].mxu0
        %508 = vmatprep.mubr.f32.mxu0 %v369
        %509 = vmatmul.mubr.f32.gmra.mrb[0].mxu0 %v368
        %v510 = vpop.f32.mrb[0].mxu0
        %v511 = vadd.f32 %v387, %v510
        %v512 = vpop.f32.mrb[0].mxu0
        %513 = vmatprep.mubr.f32.mxu0 %v372
        %514 = vmatmul.mubr.f32.gmra.mrb[0].mxu0 %v371
        %v515 = vpop.f32.mrb[0].mxu0
        %v516 = vadd.f32 %v387, %v515
        %v517 = vpop.f32.mrb[0].mxu0
        %518 = vmatprep.mubr.f32.mxu0 %v375
        %519 = vmatmul.mubr.f32.gmra.mrb[0].mxu0 %v374
        %v520 = vpop.f32.mrb[0].mxu0
        %v521 = vadd.f32 %v387, %v520
        %v522 = vpop.f32.mrb[0].mxu0
        %523 = vmatprep.mubr.f32.mxu0 %v378
        %524 = vmatmul.mubr.f32.gmra.mrb[0].mxu0 %v377
        %v525 = vpop.f32.mrb[0].mxu0
        %v526 = vadd.f32 %v387, %v525
        %v527 = vpop.f32.mrb[0].mxu0
        %528 = vmatprep.mubr.f32.mxu0 %v381
        %529 = vmatmul.mubr.f32.gmra.mrb[0].mxu0 %v380
        %v530 = vpop.f32.mrb[0].mxu0
        %v531 = vadd.f32 %v387, %v530
        %v532 = vpop.f32.mrb[0].mxu0
        %533 = vdwg.mxu0
        %534 = vmatprep.subr.mxu0 0.0
        %535 = vmatpush1.msra.mxu0 %v318
        %536 = vmatprep.subr.mxu0 0.0
        %537 = vmatpush1.msra.mxu0 %v319
        %538 = vmatprep.subr.mxu0 0.0
        %539 = vmatpush1.msra.mxu0 %v320
        %540 = vmatprep.subr.mxu0 0.0
        %541 = vmatpush1.msra.mxu0 %v321
        %542 = vmatprep.subr.mxu0 0.0
        %543 = vmatpush1.msra.mxu0 %v322
        %544 = vmatprep.subr.mxu0 0.0
        %545 = vmatpush1.msra.mxu0 %v323
        %546 = vmatprep.subr.mxu0 0.0
        %547 = vmatpush1.msra.mxu0 %v324
        %548 = vmatprep.subr.mxu0 0.0
        %549 = vmatpush1.msra.mxu0 %v325
        %550 = vmatprep.subr.mxu0 0.0
        %551 = vmatpush1.msra.mxu0 %v326
        %552 = vmatprep.subr.mxu0 0.0
        %553 = vmatpush1.msra.mxu0 %v327
        %554 = vmatprep.subr.mxu0 0.0
        %555 = vmatpush1.msra.mxu0 %v328
        %556 = vmatprep.subr.mxu0 0.0
        %557 = vmatpush1.msra.mxu0 %v329
        %558 = vmatprep.subr.mxu0 0.0
        %559 = vmatpush1.msra.mxu0 %v330
        %560 = vmatprep.subr.mxu0 0.0
        %561 = vmatpush1.msra.mxu0 %v331
        %562 = vmatprep.subr.mxu0 0.0
        %563 = vmatpush1.msra.mxu0 %v332
        %564 = vmatprep.subr.mxu0 0.0
        %565 = vmatpush1.msra.mxu0 %v333
        %566 = vmatprep.subr.mxu0 0.0
        %567 = vmatpush1.msra.mxu0 0.0
        %568 = vmatprep.subr.mxu0 0.0
        %569 = vmatpush1.msra.mxu0 0.0
        %570 = vmatprep.subr.mxu0 0.0
        %571 = vmatpush1.msra.mxu0 0.0
        %572 = vmatprep.subr.mxu0 0.0
        %573 = vmatpush1.msra.mxu0 0.0
        %574 = vmatprep.subr.mxu0 0.0
        %575 = vmatpush1.msra.mxu0 0.0
        %576 = vmatprep.subr.mxu0 0.0
        %577 = vmatpush1.msra.mxu0 0.0
        %578 = vmatprep.subr.mxu0 0.0
        %579 = vmatpush1.msra.mxu0 0.0
        %580 = vmatprep.subr.mxu0 0.0
        %581 = vmatpush1.msra.mxu0 0.0
        %582 = vmatprep.subr.mxu0 0.0
        %583 = vmatpush1.msra.mxu0 0.0
        %584 = vmatprep.subr.mxu0 0.0
        %585 = vmatpush1.msra.mxu0 0.0
        %586 = vmatprep.subr.mxu0 0.0
        %587 = vmatpush1.msra.mxu0 0.0
        %588 = vmatprep.subr.mxu0 0.0
        %589 = vmatpush1.msra.mxu0 0.0
        %590 = vmatprep.subr.mxu0 0.0
        %591 = vmatpush1.msra.mxu0 0.0
        %592 = vmatprep.subr.mxu0 0.0
        %593 = vmatpush1.msra.mxu0 0.0
        %594 = vmatprep.subr.mxu0 0.0
        %595 = vmatpush1.msra.mxu0 0.0
        %596 = vmatprep.subr.mxu0 0.0
        %597 = vmatpush1.msra.mxu0 0.0
        %598 = vmatprep.mubr.f32.mxu0 0.0
        %599 = vmatmul.mubr.f32.gmra.mrb[0].mxu0 %v337
        %v600 = vpop.f32.mrb[0].mxu0
        %v601 = vadd.f32 %v456, %v600
        %v602 = vpop.f32.mrb[0].mxu0
        %603 = vmatprep.mubr.f32.mxu0 0.0
        %604 = vmatmul.mubr.f32.gmra.mrb[0].mxu0 %v340
        %v605 = vpop.f32.mrb[0].mxu0
        %v606 = vadd.f32 %v461, %v605
        %v607 = vpop.f32.mrb[0].mxu0
        %608 = vmatprep.mubr.f32.mxu0 0.0
        %609 = vmatmul.mubr.f32.gmra.mrb[0].mxu0 %v343
        %v610 = vpop.f32.mrb[0].mxu0
        %v611 = vadd.f32 %v466, %v610
        %v612 = vpop.f32.mrb[0].mxu0
        %613 = vmatprep.mubr.f32.mxu0 0.0
        %614 = vmatmul.mubr.f32.gmra.mrb[0].mxu0 %v346
        %v615 = vpop.f32.mrb[0].mxu0
        %v616 = vadd.f32 %v471, %v615
        %v617 = vpop.f32.mrb[0].mxu0
        %618 = vmatprep.mubr.f32.mxu0 0.0
        %619 = vmatmul.mubr.f32.gmra.mrb[0].mxu0 %v349
        %v620 = vpop.f32.mrb[0].mxu0
        %v621 = vadd.f32 %v476, %v620
        %v622 = vpop.f32.mrb[0].mxu0
        %623 = vmatprep.mubr.f32.mxu0 0.0
        %624 = vmatmul.mubr.f32.gmra.mrb[0].mxu0 %v352
        %v625 = vpop.f32.mrb[0].mxu0
        %v626 = vadd.f32 %v481, %v625
        %v627 = vpop.f32.mrb[0].mxu0
        %628 = vmatprep.mubr.f32.mxu0 0.0
        %629 = vmatmul.mubr.f32.gmra.mrb[0].mxu0 %v355
        %v630 = vpop.f32.mrb[0].mxu0
        %v631 = vadd.f32 %v486, %v630
        %v632 = vpop.f32.mrb[0].mxu0
        %633 = vmatprep.mubr.f32.mxu0 0.0
        %634 = vmatmul.mubr.f32.gmra.mrb[0].mxu0 %v358
        %v635 = vpop.f32.mrb[0].mxu0
        %v636 = vadd.f32 %v491, %v635
        %v637 = vpop.f32.mrb[0].mxu0
        %638 = vmatprep.mubr.f32.mxu0 0.0
        %639 = vmatmul.mubr.f32.gmra.mrb[0].mxu0 %v361
        %v640 = vpop.f32.mrb[0].mxu0
        %v641 = vadd.f32 %v496, %v640
        %v642 = vpop.f32.mrb[0].mxu0
        %643 = vmatprep.mubr.f32.mxu0 0.0
        %644 = vmatmul.mubr.f32.gmra.mrb[0].mxu0 %v364
        %v645 = vpop.f32.mrb[0].mxu0
        %v646 = vadd.f32 %v501, %v645
        %v647 = vpop.f32.mrb[0].mxu0
        %648 = vmatprep.mubr.f32.mxu0 0.0
        %649 = vmatmul.mubr.f32.gmra.mrb[0].mxu0 %v367
        %v650 = vpop.f32.mrb[0].mxu0
        %v651 = vadd.f32 %v506, %v650
        %v652 = vpop.f32.mrb[0].mxu0
        %653 = vmatprep.mubr.f32.mxu0 0.0
        %654 = vmatmul.mubr.f32.gmra.mrb[0].mxu0 %v370
        %v655 = vpop.f32.mrb[0].mxu0
        %v656 = vadd.f32 %v511, %v655
        %v657 = vpop.f32.mrb[0].mxu0
        %658 = vmatprep.mubr.f32.mxu0 0.0
        %659 = vmatmul.mubr.f32.gmra.mrb[0].mxu0 %v373
        %v660 = vpop.f32.mrb[0].mxu0
        %v661 = vadd.f32 %v516, %v660
        %v662 = vpop.f32.mrb[0].mxu0
        %663 = vmatprep.mubr.f32.mxu0 0.0
        %664 = vmatmul.mubr.f32.gmra.mrb[0].mxu0 %v376
        %v665 = vpop.f32.mrb[0].mxu0
        %v666 = vadd.f32 %v521, %v665
        %v667 = vpop.f32.mrb[0].mxu0
        %668 = vmatprep.mubr.f32.mxu0 0.0
        %669 = vmatmul.mubr.f32.gmra.mrb[0].mxu0 %v379
        %v670 = vpop.f32.mrb[0].mxu0
        %v671 = vadd.f32 %v526, %v670
        %v672 = vpop.f32.mrb[0].mxu0
        %673 = vmatprep.mubr.f32.mxu0 0.0
        %674 = vmatmul.mubr.f32.gmra.mrb[0].mxu0 %v382
        %v675 = vpop.f32.mrb[0].mxu0
        %v676 = vadd.f32 %v531, %v675
        %v677 = vpop.f32.mrb[0].mxu0
        %678 = vdwg.mxu0
        %v679 = vsub.f32 0.0, %v601
        %v680 = vsub.f32 0.0, %v606
        %v681 = vsub.f32 0.0, %v611
        %v682 = vsub.f32 0.0, %v616
        %v683 = vsub.f32 0.0, %v621
        %v684 = vsub.f32 0.0, %v626
        %v685 = vsub.f32 0.0, %v631
        %v686 = vsub.f32 0.0, %v636
        %v687 = vsub.f32 0.0, %v641
        %v688 = vsub.f32 0.0, %v646
        %v689 = vsub.f32 0.0, %v651
        %v690 = vsub.f32 0.0, %v656
        %v691 = vsub.f32 0.0, %v661
        %v692 = vsub.f32 0.0, %v666
        %v693 = vsub.f32 0.0, %v671
        %v694 = vsub.f32 0.0, %v676
        %v695 = vmul.f32 %v679, 1.442695
        %v696 = vpow.pop %v695
        %v697 = vmul.f32 %v680, 1.442695
        %v698 = vpow.pop %v697
        %v699 = vmul.f32 %v681, 1.442695
        %v700 = vpow.pop %v699
        %v701 = vmul.f32 %v682, 1.442695
        %v702 = vpow.pop %v701
        %v703 = vmul.f32 %v683, 1.442695
        %v704 = vpow.pop %v703
        %v705 = vmul.f32 %v684, 1.442695
        %v706 = vpow.pop %v705
        %v707 = vmul.f32 %v685, 1.442695
        %v708 = vpow.pop %v707
        %v709 = vmul.f32 %v686, 1.442695
        %v710 = vpow.pop %v709
        %v711 = vmul.f32 %v687, 1.442695
        %v712 = vpow.pop %v711
        %v713 = vmul.f32 %v688, 1.442695
        %v714 = vpow.pop %v713
        %v715 = vmul.f32 %v689, 1.442695
        %v716 = vpow.pop %v715
        %v717 = vmul.f32 %v690, 1.442695
        %v718 = vpow.pop %v717
        %v719 = vmul.f32 %v691, 1.442695
        %v720 = vpow.pop %v719
        %v721 = vmul.f32 %v692, 1.442695
        %v722 = vpow.pop %v721
        %v723 = vmul.f32 %v693, 1.442695
        %v724 = vpow.pop %v723
        %v725 = vmul.f32 %v694, 1.442695
        %v726 = vpow.pop %v725
        %v727 = vadd.f32 %v696, 1.0
        %v728 = vadd.f32 %v698, 1.0
        %v729 = vadd.f32 %v700, 1.0
        %v730 = vadd.f32 %v702, 1.0
        %v731 = vadd.f32 %v704, 1.0
        %v732 = vadd.f32 %v706, 1.0
        %v733 = vadd.f32 %v708, 1.0
        %v734 = vadd.f32 %v710, 1.0
        %v735 = vadd.f32 %v712, 1.0
        %v736 = vadd.f32 %v714, 1.0
        %v737 = vadd.f32 %v716, 1.0
        %v738 = vadd.f32 %v718, 1.0
        %v739 = vadd.f32 %v720, 1.0
        %v740 = vadd.f32 %v722, 1.0
        %v741 = vadd.f32 %v724, 1.0
        %v742 = vadd.f32 %v726, 1.0
        %v743 = vrcp.pop %v727
        %v744 = vrcp.pop %v728
        %v745 = vrcp.pop %v729
        %v746 = vrcp.pop %v730
        %v747 = vrcp.pop %v731
        %v748 = vrcp.pop %v732
        %v749 = vrcp.pop %v733
        %v750 = vrcp.pop %v734
        %v751 = vrcp.pop %v735
        %v752 = vrcp.pop %v736
        %v753 = vrcp.pop %v737
        %v754 = vrcp.pop %v738
        %v755 = vrcp.pop %v739
        %v756 = vrcp.pop %v740
        %v757 = vrcp.pop %v741
        %v758 = vrcp.pop %v742
        %v759 = vmul.f32 %v601, %v743
        %v760 = vmul.f32 %v606, %v744
        %v761 = vmul.f32 %v611, %v745
        %v762 = vmul.f32 %v616, %v746
        %v763 = vmul.f32 %v621, %v747
        %v764 = vmul.f32 %v626, %v748
        %v765 = vmul.f32 %v631, %v749
        %v766 = vmul.f32 %v636, %v750
        %v767 = vmul.f32 %v641, %v751
        %v768 = vmul.f32 %v646, %v752
        %v769 = vmul.f32 %v651, %v753
        %v770 = vmul.f32 %v656, %v754
        %v771 = vmul.f32 %v661, %v755
        %v772 = vmul.f32 %v666, %v756
        %v773 = vmul.f32 %v671, %v757
        %v774 = vmul.f32 %v676, %v758
        %775 = vst [vmem:[#allocation2 + $0x8] sm:$0xff] %v759
        %776 = vst [vmem:[#allocation2 + $0x20] sm:$0xff] %v760
        %777 = vst [vmem:[#allocation2 + $0x38] sm:$0xff] %v761
        %778 = vst [vmem:[#allocation2 + $0x50] sm:$0xff] %v762
        %779 = vst [vmem:[#allocation2 + $0x68] sm:$0xff] %v763
        %780 = vst [vmem:[#allocation2 + $0x80] sm:$0xff] %v764
        %781 = vst [vmem:[#allocation2 + $0x98] sm:$0xff] %v765
        %782 = vst [vmem:[#allocation2 + $0xb0] sm:$0xff] %v766
        %783 = vst [vmem:[#allocation2 + $0xc8] sm:$0xff] %v767
        %784 = vst [vmem:[#allocation2 + $0xe0] sm:$0xff] %v768
        %785 = vst [vmem:[#allocation2 + $0xf8] sm:$0xff] %v769
        %786 = vst [vmem:[#allocation2 + $0x110] sm:$0xff] %v770
        %787 = vst [vmem:[#allocation2 + $0x128] sm:$0xff] %v771
        %788 = vst [vmem:[#allocation2 + $0x140] sm:$0xff] %v772
        %789 = vst [vmem:[#allocation2 + $0x158] sm:$0xff] %v773
        %790 = vst [vmem:[#allocation2 + $0x170] sm:$0xff] %v774
        %v791 = vld [vmem:[#allocation6 + $0x8] sm:$0xff]
        %v792 = vld [vmem:[#allocation6 + $0x20] sm:$0xff]
        %v793 = vld [vmem:[#allocation6 + $0x38] sm:$0xff]
        %v794 = vld [vmem:[#allocation6 + $0x50] sm:$0xff]
        %v795 = vld [vmem:[#allocation6 + $0x68] sm:$0xff]
        %v796 = vld [vmem:[#allocation6 + $0x80] sm:$0xff]
        %v797 = vld [vmem:[#allocation6 + $0x98] sm:$0xff]
        %v798 = vld [vmem:[#allocation6 + $0xb0] sm:$0xff]
        %v799 = vld [vmem:[#allocation6 + $0xc8] sm:$0xff]
        %v800 = vld [vmem:[#allocation6 + $0xe0] sm:$0xff]
        %v801 = vld [vmem:[#allocation6 + $0xf8] sm:$0xff]
        %v802 = vld [vmem:[#allocation6 + $0x110] sm:$0xff]
        %v803 = vld [vmem:[#allocation6 + $0x128] sm:$0xff]
        %v804 = vld [vmem:[#allocation6 + $0x140] sm:$0xff]
        %v805 = vld [vmem:[#allocation6 + $0x158] sm:$0xff]
        %v806 = vld [vmem:[#allocation6 + $0x170] sm:$0xff]
        %v807 = vld [vmem:[#allocation6 + $0x188] sm:$0xff]
        %v808 = vld [vmem:[#allocation6 + $0x1a0] sm:$0xff]
        %v809 = vld [vmem:[#allocation6 + $0x1b8] sm:$0xff]
        %v810 = vld [vmem:[#allocation6 + $0x1d0] sm:$0xff]
        %v811 = vld [vmem:[#allocation6 + $0x1e8] sm:$0xff]
        %v812 = vld [vmem:[#allocation6 + $0x200] sm:$0xff]
        %v813 = vld [vmem:[#allocation6 + $0x218] sm:$0xff]
        %v814 = vld [vmem:[#allocation6 + $0x230] sm:$0xff]
        %v815 = vld [vmem:[#allocation6 + $0x248] sm:$0xff]
        %v816 = vld [vmem:[#allocation6 + $0x260] sm:$0xff]
        %v817 = vld [vmem:[#allocation6 + $0x278] sm:$0xff]
        %v818 = vld [vmem:[#allocation6 + $0x290] sm:$0xff]
        %v819 = vld [vmem:[#allocation6 + $0x2a8] sm:$0xff]
        %v820 = vld [vmem:[#allocation6 + $0x2c0] sm:$0xff]
        %v821 = vld [vmem:[#allocation6 + $0x2d8] sm:$0xff]
        %v822 = vld [vmem:[#allocation6 + $0x2f0] sm:$0xff]
        %v823 = vld [vmem:[#allocation6 + $0x308] sm:$0xff]
        %v824 = vld [vmem:[#allocation6 + $0x320] sm:$0xff]
        %v825 = vld [vmem:[#allocation6 + $0x338] sm:$0xff]
        %v826 = vld [vmem:[#allocation6 + $0x350] sm:$0xff]
        %v827 = vld [vmem:[#allocation6 + $0x368] sm:$0xff]
        %v828 = vld [vmem:[#allocation6 + $0x380] sm:$0xff]
        %v829 = vld [vmem:[#allocation6 + $0x398] sm:$0xff]
        %v830 = vld [vmem:[#allocation6 + $0x3b0] sm:$0xff]
        %v831 = vld [vmem:[#allocation6 + $0x3c8] sm:$0xff]
        %v832 = vld [vmem:[#allocation6 + $0x3e0] sm:$0xff]
        %v833 = vld [vmem:[#allocation6 + $0x3f8] sm:$0xff]
        %v834 = vld [vmem:[#allocation6 + $0x410] sm:$0xff]
        %v835 = vld [vmem:[#allocation6 + $0x428] sm:$0xff]
        %v836 = vld [vmem:[#allocation6 + $0x440] sm:$0xff]
        %v837 = vld [vmem:[#allocation6 + $0x458] sm:$0xff]
        %v838 = vld [vmem:[#allocation6 + $0x470] sm:$0xff]
        %v839 = vld [vmem:[%s2 + $0x1] sm:$0x1]
        %v840 = vld [vmem:[#allocation2] sm:$0xff]
        %v841 = vld [vmem:[#allocation2 + $0x8] sm:$0xff]
        %v842 = vld [vmem:[#allocation2 + $0x10] sm:$0xff]
        %v843 = vld [vmem:[#allocation2 + $0x18] sm:$0xff]
        %v844 = vld [vmem:[#allocation2 + $0x20] sm:$0xff]
        %v845 = vld [vmem:[#allocation2 + $0x28] sm:$0xff]
        %v846 = vld [vmem:[#allocation2 + $0x30] sm:$0xff]
        %v847 = vld [vmem:[#allocation2 + $0x38] sm:$0xff]
        %v848 = vld [vmem:[#allocation2 + $0x40] sm:$0xff]
        %v849 = vld [vmem:[#allocation2 + $0x48] sm:$0xff]
        %v850 = vld [vmem:[#allocation2 + $0x50] sm:$0xff]
        %v851 = vld [vmem:[#allocation2 + $0x58] sm:$0xff]
        %v852 = vld [vmem:[#allocation2 + $0x60] sm:$0xff]
        %v853 = vld [vmem:[#allocation2 + $0x68] sm:$0xff]
        %v854 = vld [vmem:[#allocation2 + $0x70] sm:$0xff]
        %v855 = vld [vmem:[#allocation2 + $0x78] sm:$0xff]
        %v856 = vld [vmem:[#allocation2 + $0x80] sm:$0xff]
        %v857 = vld [vmem:[#allocation2 + $0x88] sm:$0xff]
        %v858 = vld [vmem:[#allocation2 + $0x90] sm:$0xff]
        %v859 = vld [vmem:[#allocation2 + $0x98] sm:$0xff]
        %v860 = vld [vmem:[#allocation2 + $0xa0] sm:$0xff]
        %v861 = vld [vmem:[#allocation2 + $0xa8] sm:$0xff]
        %v862 = vld [vmem:[#allocation2 + $0xb0] sm:$0xff]
        %v863 = vld [vmem:[#allocation2 + $0xb8] sm:$0xff]
        %v864 = vld [vmem:[#allocation2 + $0xc0] sm:$0xff]
        %v865 = vld [vmem:[#allocation2 + $0xc8] sm:$0xff]
        %v866 = vld [vmem:[#allocation2 + $0xd0] sm:$0xff]
        %v867 = vld [vmem:[#allocation2 + $0xd8] sm:$0xff]
        %v868 = vld [vmem:[#allocation2 + $0xe0] sm:$0xff]
        %v869 = vld [vmem:[#allocation2 + $0xe8] sm:$0xff]
        %v870 = vld [vmem:[#allocation2 + $0xf0] sm:$0xff]
        %v871 = vld [vmem:[#allocation2 + $0xf8] sm:$0xff]
        %v872 = vld [vmem:[#allocation2 + $0x100] sm:$0xff]
        %v873 = vld [vmem:[#allocation2 + $0x108] sm:$0xff]
        %v874 = vld [vmem:[#allocation2 + $0x110] sm:$0xff]
        %v875 = vld [vmem:[#allocation2 + $0x118] sm:$0xff]
        %v876 = vld [vmem:[#allocation2 + $0x120] sm:$0xff]
        %v877 = vld [vmem:[#allocation2 + $0x128] sm:$0xff]
        %v878 = vld [vmem:[#allocation2 + $0x130] sm:$0xff]
        %v879 = vld [vmem:[#allocation2 + $0x138] sm:$0xff]
        %v880 = vld [vmem:[#allocation2 + $0x140] sm:$0xff]
        %v881 = vld [vmem:[#allocation2 + $0x148] sm:$0xff]
        %v882 = vld [vmem:[#allocation2 + $0x150] sm:$0xff]
        %v883 = vld [vmem:[#allocation2 + $0x158] sm:$0xff]
        %v884 = vld [vmem:[#allocation2 + $0x160] sm:$0xff]
        %v885 = vld [vmem:[#allocation2 + $0x168] sm:$0xff]
        %v886 = vld [vmem:[#allocation2 + $0x170] sm:$0xff]
        %v887 = vld [vmem:[#allocation2 + $0x178] sm:$0xff]
        %v889 = vlaneseq
        %v890 = vshrl.u32 %v889, 7
        %v891 = vsub.s32 0, %v890
        %v892 = vrot.slane %v839, %v891
        %894 = vmatprep.subr.mxu0 0.0
        %895 = vmatpush1.msra.mxu0 %v791
        %896 = vmatprep.subr.mxu0 0.0
        %897 = vmatpush1.msra.mxu0 %v792
        %898 = vmatprep.subr.mxu0 0.0
        %899 = vmatpush1.msra.mxu0 %v793
        %900 = vmatprep.subr.mxu0 0.0
        %901 = vmatpush1.msra.mxu0 %v794
        %902 = vmatprep.subr.mxu0 0.0
        %903 = vmatpush1.msra.mxu0 %v795
        %904 = vmatprep.subr.mxu0 0.0
        %905 = vmatpush1.msra.mxu0 %v796
        %906 = vmatprep.subr.mxu0 0.0
        %907 = vmatpush1.msra.mxu0 %v797
        %908 = vmatprep.subr.mxu0 0.0
        %909 = vmatpush1.msra.mxu0 %v798
        %910 = vmatprep.subr.mxu0 0.0
        %911 = vmatpush1.msra.mxu0 %v799
        %912 = vmatprep.subr.mxu0 0.0
        %913 = vmatpush1.msra.mxu0 %v800
        %914 = vmatprep.subr.mxu0 0.0
        %915 = vmatpush1.msra.mxu0 %v801
        %916 = vmatprep.subr.mxu0 0.0
        %917 = vmatpush1.msra.mxu0 %v802
        %918 = vmatprep.subr.mxu0 0.0
        %919 = vmatpush1.msra.mxu0 %v803
        %920 = vmatprep.subr.mxu0 0.0
        %921 = vmatpush1.msra.mxu0 %v804
        %922 = vmatprep.subr.mxu0 0.0
        %923 = vmatpush1.msra.mxu0 %v805
        %924 = vmatprep.subr.mxu0 0.0
        %925 = vmatpush1.msra.mxu0 %v806
        %926 = vmatprep.subr.mxu0 0.0
        %927 = vmatpush1.msra.mxu0 %v807
        %928 = vmatprep.subr.mxu0 0.0
        %929 = vmatpush1.msra.mxu0 %v808
        %930 = vmatprep.subr.mxu0 0.0
        %931 = vmatpush1.msra.mxu0 %v809
        %932 = vmatprep.subr.mxu0 0.0
        %933 = vmatpush1.msra.mxu0 %v810
        %934 = vmatprep.subr.mxu0 0.0
        %935 = vmatpush1.msra.mxu0 %v811
        %936 = vmatprep.subr.mxu0 0.0
        %937 = vmatpush1.msra.mxu0 %v812
        %938 = vmatprep.subr.mxu0 0.0
        %939 = vmatpush1.msra.mxu0 %v813
        %940 = vmatprep.subr.mxu0 0.0
        %941 = vmatpush1.msra.mxu0 %v814
        %942 = vmatprep.subr.mxu0 0.0
        %943 = vmatpush1.msra.mxu0 %v815
        %944 = vmatprep.subr.mxu0 0.0
        %945 = vmatpush1.msra.mxu0 %v816
        %946 = vmatprep.subr.mxu0 0.0
        %947 = vmatpush1.msra.mxu0 %v817
        %948 = vmatprep.subr.mxu0 0.0
        %949 = vmatpush1.msra.mxu0 %v818
        %950 = vmatprep.subr.mxu0 0.0
        %951 = vmatpush1.msra.mxu0 %v819
        %952 = vmatprep.subr.mxu0 0.0
        %953 = vmatpush1.msra.mxu0 %v820
        %954 = vmatprep.subr.mxu0 0.0
        %955 = vmatpush1.msra.mxu0 %v821
        %956 = vmatprep.subr.mxu0 0.0
        %957 = vmatpush1.msra.mxu0 %v822
        %958 = vmatprep.mubr.f32.mxu0 %v841
        %959 = vmatmul.mubr.f32.gmra.mrb[0].mxu0 %v840
        %v960 = vpop.f32.mrb[0].mxu0
        %v961 = vadd.f32 %v892, %v960
        %v962 = vpop.f32.mrb[0].mxu0
        %963 = vmatprep.mubr.f32.mxu0 %v844
        %964 = vmatmul.mubr.f32.gmra.mrb[0].mxu0 %v843
        %v965 = vpop.f32.mrb[0].mxu0
        %v966 = vadd.f32 %v892, %v965
        %v967 = vpop.f32.mrb[0].mxu0
        %968 = vmatprep.mubr.f32.mxu0 %v847
        %969 = vmatmul.mubr.f32.gmra.mrb[0].mxu0 %v846
        %v970 = vpop.f32.mrb[0].mxu0
        %v971 = vadd.f32 %v892, %v970
        %v972 = vpop.f32.mrb[0].mxu0
        %973 = vmatprep.mubr.f32.mxu0 %v850
        %974 = vmatmul.mubr.f32.gmra.mrb[0].mxu0 %v849
        %v975 = vpop.f32.mrb[0].mxu0
        %v976 = vadd.f32 %v892, %v975
        %v977 = vpop.f32.mrb[0].mxu0
        %978 = vmatprep.mubr.f32.mxu0 %v853
        %979 = vmatmul.mubr.f32.gmra.mrb[0].mxu0 %v852
        %v980 = vpop.f32.mrb[0].mxu0
        %v981 = vadd.f32 %v892, %v980
        %v982 = vpop.f32.mrb[0].mxu0
        %983 = vmatprep.mubr.f32.mxu0 %v856
        %984 = vmatmul.mubr.f32.gmra.mrb[0].mxu0 %v855
        %v985 = vpop.f32.mrb[0].mxu0
        %v986 = vadd.f32 %v892, %v985
        %v987 = vpop.f32.mrb[0].mxu0
        %988 = vmatprep.mubr.f32.mxu0 %v859
        %989 = vmatmul.mubr.f32.gmra.mrb[0].mxu0 %v858
        %v990 = vpop.f32.mrb[0].mxu0
        %v991 = vadd.f32 %v892, %v990
        %v992 = vpop.f32.mrb[0].mxu0
        %993 = vmatprep.mubr.f32.mxu0 %v862
        %994 = vmatmul.mubr.f32.gmra.mrb[0].mxu0 %v861
        %v995 = vpop.f32.mrb[0].mxu0
        %v996 = vadd.f32 %v892, %v995
        %v997 = vpop.f32.mrb[0].mxu0
        %998 = vmatprep.mubr.f32.mxu0 %v865
        %999 = vmatmul.mubr.f32.gmra.mrb[0].mxu0 %v864
        %v1000 = vpop.f32.mrb[0].mxu0
        %v1001 = vadd.f32 %v892, %v1000
        %v1002 = vpop.f32.mrb[0].mxu0
        %1003 = vmatprep.mubr.f32.mxu0 %v868
        %1004 = vmatmul.mubr.f32.gmra.mrb[0].mxu0 %v867
        %v1005 = vpop.f32.mrb[0].mxu0
        %v1006 = vadd.f32 %v892, %v1005
        %v1007 = vpop.f32.mrb[0].mxu0
        %1008 = vmatprep.mubr.f32.mxu0 %v871
        %1009 = vmatmul.mubr.f32.gmra.mrb[0].mxu0 %v870
        %v1010 = vpop.f32.mrb[0].mxu0
        %v1011 = vadd.f32 %v892, %v1010
        %v1012 = vpop.f32.mrb[0].mxu0
        %1013 = vmatprep.mubr.f32.mxu0 %v874
        %1014 = vmatmul.mubr.f32.gmra.mrb[0].mxu0 %v873
        %v1015 = vpop.f32.mrb[0].mxu0
        %v1016 = vadd.f32 %v892, %v1015
        %v1017 = vpop.f32.mrb[0].mxu0
        %1018 = vmatprep.mubr.f32.mxu0 %v877
        %1019 = vmatmul.mubr.f32.gmra.mrb[0].mxu0 %v876
        %v1020 = vpop.f32.mrb[0].mxu0
        %v1021 = vadd.f32 %v892, %v1020
        %v1022 = vpop.f32.mrb[0].mxu0
        %1023 = vmatprep.mubr.f32.mxu0 %v880
        %1024 = vmatmul.mubr.f32.gmra.mrb[0].mxu0 %v879
        %v1025 = vpop.f32.mrb[0].mxu0
        %v1026 = vadd.f32 %v892, %v1025
        %v1027 = vpop.f32.mrb[0].mxu0
        %1028 = vmatprep.mubr.f32.mxu0 %v883
        %1029 = vmatmul.mubr.f32.gmra.mrb[0].mxu0 %v882
        %v1030 = vpop.f32.mrb[0].mxu0
        %v1031 = vadd.f32 %v892, %v1030
        %v1032 = vpop.f32.mrb[0].mxu0
        %1033 = vmatprep.mubr.f32.mxu0 %v886
        %1034 = vmatmul.mubr.f32.gmra.mrb[0].mxu0 %v885
        %v1035 = vpop.f32.mrb[0].mxu0
        %v1036 = vadd.f32 %v892, %v1035
        %v1037 = vpop.f32.mrb[0].mxu0
        %1038 = vdwg.mxu0
        %1039 = vmatprep.subr.mxu0 0.0
        %1040 = vmatpush1.msra.mxu0 %v823
        %1041 = vmatprep.subr.mxu0 0.0
        %1042 = vmatpush1.msra.mxu0 %v824
        %1043 = vmatprep.subr.mxu0 0.0
        %1044 = vmatpush1.msra.mxu0 %v825
        %1045 = vmatprep.subr.mxu0 0.0
        %1046 = vmatpush1.msra.mxu0 %v826
        %1047 = vmatprep.subr.mxu0 0.0
        %1048 = vmatpush1.msra.mxu0 %v827
        %1049 = vmatprep.subr.mxu0 0.0
        %1050 = vmatpush1.msra.mxu0 %v828
        %1051 = vmatprep.subr.mxu0 0.0
        %1052 = vmatpush1.msra.mxu0 %v829
        %1053 = vmatprep.subr.mxu0 0.0
        %1054 = vmatpush1.msra.mxu0 %v830
        %1055 = vmatprep.subr.mxu0 0.0
        %1056 = vmatpush1.msra.mxu0 %v831
        %1057 = vmatprep.subr.mxu0 0.0
        %1058 = vmatpush1.msra.mxu0 %v832
        %1059 = vmatprep.subr.mxu0 0.0
        %1060 = vmatpush1.msra.mxu0 %v833
        %1061 = vmatprep.subr.mxu0 0.0
        %1062 = vmatpush1.msra.mxu0 %v834
        %1063 = vmatprep.subr.mxu0 0.0
        %1064 = vmatpush1.msra.mxu0 %v835
        %1065 = vmatprep.subr.mxu0 0.0
        %1066 = vmatpush1.msra.mxu0 %v836
        %1067 = vmatprep.subr.mxu0 0.0
        %1068 = vmatpush1.msra.mxu0 %v837
        %1069 = vmatprep.subr.mxu0 0.0
        %1070 = vmatpush1.msra.mxu0 %v838
        %1071 = vmatprep.subr.mxu0 0.0
        %1072 = vmatpush1.msra.mxu0 0.0
        %1073 = vmatprep.subr.mxu0 0.0
        %1074 = vmatpush1.msra.mxu0 0.0
        %1075 = vmatprep.subr.mxu0 0.0
        %1076 = vmatpush1.msra.mxu0 0.0
        %1077 = vmatprep.subr.mxu0 0.0
        %1078 = vmatpush1.msra.mxu0 0.0
        %1079 = vmatprep.subr.mxu0 0.0
        %1080 = vmatpush1.msra.mxu0 0.0
        %1081 = vmatprep.subr.mxu0 0.0
        %1082 = vmatpush1.msra.mxu0 0.0
        %1083 = vmatprep.subr.mxu0 0.0
        %1084 = vmatpush1.msra.mxu0 0.0
        %1085 = vmatprep.subr.mxu0 0.0
        %1086 = vmatpush1.msra.mxu0 0.0
        %1087 = vmatprep.subr.mxu0 0.0
        %1088 = vmatpush1.msra.mxu0 0.0
        %1089 = vmatprep.subr.mxu0 0.0
        %1090 = vmatpush1.msra.mxu0 0.0
        %1091 = vmatprep.subr.mxu0 0.0
        %1092 = vmatpush1.msra.mxu0 0.0
        %1093 = vmatprep.subr.mxu0 0.0
        %1094 = vmatpush1.msra.mxu0 0.0
        %1095 = vmatprep.subr.mxu0 0.0
        %1096 = vmatpush1.msra.mxu0 0.0
        %1097 = vmatprep.subr.mxu0 0.0
        %1098 = vmatpush1.msra.mxu0 0.0
        %1099 = vmatprep.subr.mxu0 0.0
        %1100 = vmatpush1.msra.mxu0 0.0
        %1101 = vmatprep.subr.mxu0 0.0
        %1102 = vmatpush1.msra.mxu0 0.0
        %1103 = vmatprep.mubr.f32.mxu0 0.0
        %1104 = vmatmul.mubr.f32.gmra.mrb[0].mxu0 %v842
        %v1105 = vpop.f32.mrb[0].mxu0
        %v1106 = vadd.f32 %v961, %v1105
        %v1107 = vpop.f32.mrb[0].mxu0
        %1108 = vmatprep.mubr.f32.mxu0 0.0
        %1109 = vmatmul.mubr.f32.gmra.mrb[0].mxu0 %v845
        %v1110 = vpop.f32.mrb[0].mxu0
        %v1111 = vadd.f32 %v966, %v1110
        %v1112 = vpop.f32.mrb[0].mxu0
        %1113 = vmatprep.mubr.f32.mxu0 0.0
        %1114 = vmatmul.mubr.f32.gmra.mrb[0].mxu0 %v848
        %v1115 = vpop.f32.mrb[0].mxu0
        %v1116 = vadd.f32 %v971, %v1115
        %v1117 = vpop.f32.mrb[0].mxu0
        %1118 = vmatprep.mubr.f32.mxu0 0.0
        %1119 = vmatmul.mubr.f32.gmra.mrb[0].mxu0 %v851
        %v1120 = vpop.f32.mrb[0].mxu0
        %v1121 = vadd.f32 %v976, %v1120
        %v1122 = vpop.f32.mrb[0].mxu0
        %1123 = vmatprep.mubr.f32.mxu0 0.0
        %1124 = vmatmul.mubr.f32.gmra.mrb[0].mxu0 %v854
        %v1125 = vpop.f32.mrb[0].mxu0
        %v1126 = vadd.f32 %v981, %v1125
        %v1127 = vpop.f32.mrb[0].mxu0
        %1128 = vmatprep.mubr.f32.mxu0 0.0
        %1129 = vmatmul.mubr.f32.gmra.mrb[0].mxu0 %v857
        %v1130 = vpop.f32.mrb[0].mxu0
        %v1131 = vadd.f32 %v986, %v1130
        %v1132 = vpop.f32.mrb[0].mxu0
        %1133 = vmatprep.mubr.f32.mxu0 0.0
        %1134 = vmatmul.mubr.f32.gmra.mrb[0].mxu0 %v860
        %v1135 = vpop.f32.mrb[0].mxu0
        %v1136 = vadd.f32 %v991, %v1135
        %v1137 = vpop.f32.mrb[0].mxu0
        %1138 = vmatprep.mubr.f32.mxu0 0.0
        %1139 = vmatmul.mubr.f32.gmra.mrb[0].mxu0 %v863
        %v1140 = vpop.f32.mrb[0].mxu0
        %v1141 = vadd.f32 %v996, %v1140
        %v1142 = vpop.f32.mrb[0].mxu0
        %1143 = vmatprep.mubr.f32.mxu0 0.0
        %1144 = vmatmul.mubr.f32.gmra.mrb[0].mxu0 %v866
        %v1145 = vpop.f32.mrb[0].mxu0
        %v1146 = vadd.f32 %v1001, %v1145
        %v1147 = vpop.f32.mrb[0].mxu0
        %1148 = vmatprep.mubr.f32.mxu0 0.0
        %1149 = vmatmul.mubr.f32.gmra.mrb[0].mxu0 %v869
        %v1150 = vpop.f32.mrb[0].mxu0
        %v1151 = vadd.f32 %v1006, %v1150
        %v1152 = vpop.f32.mrb[0].mxu0
        %1153 = vmatprep.mubr.f32.mxu0 0.0
        %1154 = vmatmul.mubr.f32.gmra.mrb[0].mxu0 %v872
        %v1155 = vpop.f32.mrb[0].mxu0
        %v1156 = vadd.f32 %v1011, %v1155
        %v1157 = vpop.f32.mrb[0].mxu0
        %1158 = vmatprep.mubr.f32.mxu0 0.0
        %1159 = vmatmul.mubr.f32.gmra.mrb[0].mxu0 %v875
        %v1160 = vpop.f32.mrb[0].mxu0
        %v1161 = vadd.f32 %v1016, %v1160
        %v1162 = vpop.f32.mrb[0].mxu0
        %1163 = vmatprep.mubr.f32.mxu0 0.0
        %1164 = vmatmul.mubr.f32.gmra.mrb[0].mxu0 %v878
        %v1165 = vpop.f32.mrb[0].mxu0
        %v1166 = vadd.f32 %v1021, %v1165
        %v1167 = vpop.f32.mrb[0].mxu0
        %1168 = vmatprep.mubr.f32.mxu0 0.0
        %1169 = vmatmul.mubr.f32.gmra.mrb[0].mxu0 %v881
        %v1170 = vpop.f32.mrb[0].mxu0
        %v1171 = vadd.f32 %v1026, %v1170
        %v1172 = vpop.f32.mrb[0].mxu0
        %1173 = vmatprep.mubr.f32.mxu0 0.0
        %1174 = vmatmul.mubr.f32.gmra.mrb[0].mxu0 %v884
        %v1175 = vpop.f32.mrb[0].mxu0
        %v1176 = vadd.f32 %v1031, %v1175
        %v1177 = vpop.f32.mrb[0].mxu0
        %1178 = vmatprep.mubr.f32.mxu0 0.0
        %1179 = vmatmul.mubr.f32.gmra.mrb[0].mxu0 %v887
        %v1180 = vpop.f32.mrb[0].mxu0
        %v1181 = vadd.f32 %v1036, %v1180
        %v1182 = vpop.f32.mrb[0].mxu0
        %1183 = vdwg.mxu0
        %v1184 = vsub.f32 0.0, %v1106
        %v1185 = vsub.f32 0.0, %v1111
        %v1186 = vsub.f32 0.0, %v1116
        %v1187 = vsub.f32 0.0, %v1121
        %v1188 = vsub.f32 0.0, %v1126
        %v1189 = vsub.f32 0.0, %v1131
        %v1190 = vsub.f32 0.0, %v1136
        %v1191 = vsub.f32 0.0, %v1141
        %v1192 = vsub.f32 0.0, %v1146
        %v1193 = vsub.f32 0.0, %v1151
        %v1194 = vsub.f32 0.0, %v1156
        %v1195 = vsub.f32 0.0, %v1161
        %v1196 = vsub.f32 0.0, %v1166
        %v1197 = vsub.f32 0.0, %v1171
        %v1198 = vsub.f32 0.0, %v1176
        %v1199 = vsub.f32 0.0, %v1181
        %v1200 = vmul.f32 %v1184, 1.442695
        %v1201 = vpow.pop %v1200
        %v1202 = vmul.f32 %v1185, 1.442695
        %v1203 = vpow.pop %v1202
        %v1204 = vmul.f32 %v1186, 1.442695
        %v1205 = vpow.pop %v1204
        %v1206 = vmul.f32 %v1187, 1.442695
        %v1207 = vpow.pop %v1206
        %v1208 = vmul.f32 %v1188, 1.442695
        %v1209 = vpow.pop %v1208
        %v1210 = vmul.f32 %v1189, 1.442695
        %v1211 = vpow.pop %v1210
        %v1212 = vmul.f32 %v1190, 1.442695
        %v1213 = vpow.pop %v1212
        %v1214 = vmul.f32 %v1191, 1.442695
        %v1215 = vpow.pop %v1214
        %v1216 = vmul.f32 %v1192, 1.442695
        %v1217 = vpow.pop %v1216
        %v1218 = vmul.f32 %v1193, 1.442695
        %v1219 = vpow.pop %v1218
        %v1220 = vmul.f32 %v1194, 1.442695
        %v1221 = vpow.pop %v1220
        %v1222 = vmul.f32 %v1195, 1.442695
        %v1223 = vpow.pop %v1222
        %v1224 = vmul.f32 %v1196, 1.442695
        %v1225 = vpow.pop %v1224
        %v1226 = vmul.f32 %v1197, 1.442695
        %v1227 = vpow.pop %v1226
        %v1228 = vmul.f32 %v1198, 1.442695
        %v1229 = vpow.pop %v1228
        %v1230 = vmul.f32 %v1199, 1.442695
        %v1231 = vpow.pop %v1230
        %v1232 = vadd.f32 %v1201, 1.0
        %v1233 = vadd.f32 %v1203, 1.0
        %v1234 = vadd.f32 %v1205, 1.0
        %v1235 = vadd.f32 %v1207, 1.0
        %v1236 = vadd.f32 %v1209, 1.0
        %v1237 = vadd.f32 %v1211, 1.0
        %v1238 = vadd.f32 %v1213, 1.0
        %v1239 = vadd.f32 %v1215, 1.0
        %v1240 = vadd.f32 %v1217, 1.0
        %v1241 = vadd.f32 %v1219, 1.0
        %v1242 = vadd.f32 %v1221, 1.0
        %v1243 = vadd.f32 %v1223, 1.0
        %v1244 = vadd.f32 %v1225, 1.0
        %v1245 = vadd.f32 %v1227, 1.0
        %v1246 = vadd.f32 %v1229, 1.0
        %v1247 = vadd.f32 %v1231, 1.0
        %v1248 = vrcp.pop %v1232
        %v1249 = vrcp.pop %v1233
        %v1250 = vrcp.pop %v1234
        %v1251 = vrcp.pop %v1235
        %v1252 = vrcp.pop %v1236
        %v1253 = vrcp.pop %v1237
        %v1254 = vrcp.pop %v1238
        %v1255 = vrcp.pop %v1239
        %v1256 = vrcp.pop %v1240
        %v1257 = vrcp.pop %v1241
        %v1258 = vrcp.pop %v1242
        %v1259 = vrcp.pop %v1243
        %v1260 = vrcp.pop %v1244
        %v1261 = vrcp.pop %v1245
        %v1262 = vrcp.pop %v1246
        %v1263 = vrcp.pop %v1247
        %v1264 = vmul.f32 %v1106, %v1248
        %v1265 = vmul.f32 %v1111, %v1249
        %v1266 = vmul.f32 %v1116, %v1250
        %v1267 = vmul.f32 %v1121, %v1251
        %v1268 = vmul.f32 %v1126, %v1252
        %v1269 = vmul.f32 %v1131, %v1253
        %v1270 = vmul.f32 %v1136, %v1254
        %v1271 = vmul.f32 %v1141, %v1255
        %v1272 = vmul.f32 %v1146, %v1256
        %v1273 = vmul.f32 %v1151, %v1257
        %v1274 = vmul.f32 %v1156, %v1258
        %v1275 = vmul.f32 %v1161, %v1259
        %v1276 = vmul.f32 %v1166, %v1260
        %v1277 = vmul.f32 %v1171, %v1261
        %v1278 = vmul.f32 %v1176, %v1262
        %v1279 = vmul.f32 %v1181, %v1263
        %1280 = vst [vmem:[#allocation2 + $0x10] sm:$0xff] %v1264
        %1281 = vst [vmem:[#allocation2 + $0x28] sm:$0xff] %v1265
        %1282 = vst [vmem:[#allocation2 + $0x40] sm:$0xff] %v1266
        %1283 = vst [vmem:[#allocation2 + $0x58] sm:$0xff] %v1267
        %1284 = vst [vmem:[#allocation2 + $0x70] sm:$0xff] %v1268
        %1285 = vst [vmem:[#allocation2 + $0x88] sm:$0xff] %v1269
        %1286 = vst [vmem:[#allocation2 + $0xa0] sm:$0xff] %v1270
        %1287 = vst [vmem:[#allocation2 + $0xb8] sm:$0xff] %v1271
        %1288 = vst [vmem:[#allocation2 + $0xd0] sm:$0xff] %v1272
        %1289 = vst [vmem:[#allocation2 + $0xe8] sm:$0xff] %v1273
        %1290 = vst [vmem:[#allocation2 + $0x100] sm:$0xff] %v1274
        %1291 = vst [vmem:[#allocation2 + $0x118] sm:$0xff] %v1275
        %1292 = vst [vmem:[#allocation2 + $0x130] sm:$0xff] %v1276
        %1293 = vst [vmem:[#allocation2 + $0x148] sm:$0xff] %v1277
        %1294 = vst [vmem:[#allocation2 + $0x160] sm:$0xff] %v1278
        %1295 = vst [vmem:[#allocation2 + $0x178] sm:$0xff] %v1279
        %v1296 = vld [vmem:[#allocation6 + $0x10] sm:$0xff]
        %v1297 = vld [vmem:[#allocation6 + $0x28] sm:$0xff]
        %v1298 = vld [vmem:[#allocation6 + $0x40] sm:$0xff]
        %v1299 = vld [vmem:[#allocation6 + $0x58] sm:$0xff]
        %v1300 = vld [vmem:[#allocation6 + $0x70] sm:$0xff]
        %v1301 = vld [vmem:[#allocation6 + $0x88] sm:$0xff]
        %v1302 = vld [vmem:[#allocation6 + $0xa0] sm:$0xff]
        %v1303 = vld [vmem:[#allocation6 + $0xb8] sm:$0xff]
        %v1304 = vld [vmem:[#allocation6 + $0xd0] sm:$0xff]
        %v1305 = vld [vmem:[#allocation6 + $0xe8] sm:$0xff]
        %v1306 = vld [vmem:[#allocation6 + $0x100] sm:$0xff]
        %v1307 = vld [vmem:[#allocation6 + $0x118] sm:$0xff]
        %v1308 = vld [vmem:[#allocation6 + $0x130] sm:$0xff]
        %v1309 = vld [vmem:[#allocation6 + $0x148] sm:$0xff]
        %v1310 = vld [vmem:[#allocation6 + $0x160] sm:$0xff]
        %v1311 = vld [vmem:[#allocation6 + $0x178] sm:$0xff]
        %v1312 = vld [vmem:[#allocation6 + $0x190] sm:$0xff]
        %v1313 = vld [vmem:[#allocation6 + $0x1a8] sm:$0xff]
        %v1314 = vld [vmem:[#allocation6 + $0x1c0] sm:$0xff]
        %v1315 = vld [vmem:[#allocation6 + $0x1d8] sm:$0xff]
        %v1316 = vld [vmem:[#allocation6 + $0x1f0] sm:$0xff]
        %v1317 = vld [vmem:[#allocation6 + $0x208] sm:$0xff]
        %v1318 = vld [vmem:[#allocation6 + $0x220] sm:$0xff]
        %v1319 = vld [vmem:[#allocation6 + $0x238] sm:$0xff]
        %v1320 = vld [vmem:[#allocation6 + $0x250] sm:$0xff]
        %v1321 = vld [vmem:[#allocation6 + $0x268] sm:$0xff]
        %v1322 = vld [vmem:[#allocation6 + $0x280] sm:$0xff]
        %v1323 = vld [vmem:[#allocation6 + $0x298] sm:$0xff]
        %v1324 = vld [vmem:[#allocation6 + $0x2b0] sm:$0xff]
        %v1325 = vld [vmem:[#allocation6 + $0x2c8] sm:$0xff]
        %v1326 = vld [vmem:[#allocation6 + $0x2e0] sm:$0xff]
        %v1327 = vld [vmem:[#allocation6 + $0x2f8] sm:$0xff]
        %v1328 = vld [vmem:[#allocation6 + $0x310] sm:$0xff]
        %v1329 = vld [vmem:[#allocation6 + $0x328] sm:$0xff]
        %v1330 = vld [vmem:[#allocation6 + $0x340] sm:$0xff]
        %v1331 = vld [vmem:[#allocation6 + $0x358] sm:$0xff]
        %v1332 = vld [vmem:[#allocation6 + $0x370] sm:$0xff]
        %v1333 = vld [vmem:[#allocation6 + $0x388] sm:$0xff]
        %v1334 = vld [vmem:[#allocation6 + $0x3a0] sm:$0xff]
        %v1335 = vld [vmem:[#allocation6 + $0x3b8] sm:$0xff]
        %v1336 = vld [vmem:[#allocation6 + $0x3d0] sm:$0xff]
        %v1337 = vld [vmem:[#allocation6 + $0x3e8] sm:$0xff]
        %v1338 = vld [vmem:[#allocation6 + $0x400] sm:$0xff]
        %v1339 = vld [vmem:[#allocation6 + $0x418] sm:$0xff]
        %v1340 = vld [vmem:[#allocation6 + $0x430] sm:$0xff]
        %v1341 = vld [vmem:[#allocation6 + $0x448] sm:$0xff]
        %v1342 = vld [vmem:[#allocation6 + $0x460] sm:$0xff]
        %v1343 = vld [vmem:[#allocation6 + $0x478] sm:$0xff]
        %v1344 = vld [vmem:[%s2 + $0x2] sm:$0x1]
        %v1345 = vld [vmem:[#allocation2] sm:$0xff]
        %v1346 = vld [vmem:[#allocation2 + $0x8] sm:$0xff]
        %v1347 = vld [vmem:[#allocation2 + $0x10] sm:$0xff]
        %v1348 = vld [vmem:[#allocation2 + $0x18] sm:$0xff]
        %v1349 = vld [vmem:[#allocation2 + $0x20] sm:$0xff]
        %v1350 = vld [vmem:[#allocation2 + $0x28] sm:$0xff]
        %v1351 = vld [vmem:[#allocation2 + $0x30] sm:$0xff]
        %v1352 = vld [vmem:[#allocation2 + $0x38] sm:$0xff]
        %v1353 = vld [vmem:[#allocation2 + $0x40] sm:$0xff]
        %v1354 = vld [vmem:[#allocation2 + $0x48] sm:$0xff]
        %v1355 = vld [vmem:[#allocation2 + $0x50] sm:$0xff]
        %v1356 = vld [vmem:[#allocation2 + $0x58] sm:$0xff]
        %v1357 = vld [vmem:[#allocation2 + $0x60] sm:$0xff]
        %v1358 = vld [vmem:[#allocation2 + $0x68] sm:$0xff]
        %v1359 = vld [vmem:[#allocation2 + $0x70] sm:$0xff]
        %v1360 = vld [vmem:[#allocation2 + $0x78] sm:$0xff]
        %v1361 = vld [vmem:[#allocation2 + $0x80] sm:$0xff]
        %v1362 = vld [vmem:[#allocation2 + $0x88] sm:$0xff]
        %v1363 = vld [vmem:[#allocation2 + $0x90] sm:$0xff]
        %v1364 = vld [vmem:[#allocation2 + $0x98] sm:$0xff]
        %v1365 = vld [vmem:[#allocation2 + $0xa0] sm:$0xff]
        %v1366 = vld [vmem:[#allocation2 + $0xa8] sm:$0xff]
        %v1367 = vld [vmem:[#allocation2 + $0xb0] sm:$0xff]
        %v1368 = vld [vmem:[#allocation2 + $0xb8] sm:$0xff]
        %v1369 = vld [vmem:[#allocation2 + $0xc0] sm:$0xff]
        %v1370 = vld [vmem:[#allocation2 + $0xc8] sm:$0xff]
        %v1371 = vld [vmem:[#allocation2 + $0xd0] sm:$0xff]
        %v1372 = vld [vmem:[#allocation2 + $0xd8] sm:$0xff]
        %v1373 = vld [vmem:[#allocation2 + $0xe0] sm:$0xff]
        %v1374 = vld [vmem:[#allocation2 + $0xe8] sm:$0xff]
        %v1375 = vld [vmem:[#allocation2 + $0xf0] sm:$0xff]
        %v1376 = vld [vmem:[#allocation2 + $0xf8] sm:$0xff]
        %v1377 = vld [vmem:[#allocation2 + $0x100] sm:$0xff]
        %v1378 = vld [vmem:[#allocation2 + $0x108] sm:$0xff]
        %v1379 = vld [vmem:[#allocation2 + $0x110] sm:$0xff]
        %v1380 = vld [vmem:[#allocation2 + $0x118] sm:$0xff]
        %v1381 = vld [vmem:[#allocation2 + $0x120] sm:$0xff]
        %v1382 = vld [vmem:[#allocation2 + $0x128] sm:$0xff]
        %v1383 = vld [vmem:[#allocation2 + $0x130] sm:$0xff]
        %v1384 = vld [vmem:[#allocation2 + $0x138] sm:$0xff]
        %v1385 = vld [vmem:[#allocation2 + $0x140] sm:$0xff]
        %v1386 = vld [vmem:[#allocation2 + $0x148] sm:$0xff]
        %v1387 = vld [vmem:[#allocation2 + $0x150] sm:$0xff]
        %v1388 = vld [vmem:[#allocation2 + $0x158] sm:$0xff]
        %v1389 = vld [vmem:[#allocation2 + $0x160] sm:$0xff]
        %v1390 = vld [vmem:[#allocation2 + $0x168] sm:$0xff]
        %v1391 = vld [vmem:[#allocation2 + $0x170] sm:$0xff]
        %v1392 = vld [vmem:[#allocation2 + $0x178] sm:$0xff]
        %v1394 = vlaneseq
        %v1395 = vshrl.u32 %v1394, 7
        %v1396 = vsub.s32 0, %v1395
        %v1397 = vrot.slane %v1344, %v1396
        %1399 = vmatprep.subr.mxu0 0.0
        %1400 = vmatpush1.msra.mxu0 %v1296
        %1401 = vmatprep.subr.mxu0 0.0
        %1402 = vmatpush1.msra.mxu0 %v1297
        %1403 = vmatprep.subr.mxu0 0.0
        %1404 = vmatpush1.msra.mxu0 %v1298
        %1405 = vmatprep.subr.mxu0 0.0
        %1406 = vmatpush1.msra.mxu0 %v1299
        %1407 = vmatprep.subr.mxu0 0.0
        %1408 = vmatpush1.msra.mxu0 %v1300
        %1409 = vmatprep.subr.mxu0 0.0
        %1410 = vmatpush1.msra.mxu0 %v1301
        %1411 = vmatprep.subr.mxu0 0.0
        %1412 = vmatpush1.msra.mxu0 %v1302
        %1413 = vmatprep.subr.mxu0 0.0
        %1414 = vmatpush1.msra.mxu0 %v1303
        %1415 = vmatprep.subr.mxu0 0.0
        %1416 = vmatpush1.msra.mxu0 %v1304
        %1417 = vmatprep.subr.mxu0 0.0
        %1418 = vmatpush1.msra.mxu0 %v1305
        %1419 = vmatprep.subr.mxu0 0.0
        %1420 = vmatpush1.msra.mxu0 %v1306
        %1421 = vmatprep.subr.mxu0 0.0
        %1422 = vmatpush1.msra.mxu0 %v1307
        %1423 = vmatprep.subr.mxu0 0.0
        %1424 = vmatpush1.msra.mxu0 %v1308
        %1425 = vmatprep.subr.mxu0 0.0
        %1426 = vmatpush1.msra.mxu0 %v1309
        %1427 = vmatprep.subr.mxu0 0.0
        %1428 = vmatpush1.msra.mxu0 %v1310
        %1429 = vmatprep.subr.mxu0 0.0
        %1430 = vmatpush1.msra.mxu0 %v1311
        %1431 = vmatprep.subr.mxu0 0.0
        %1432 = vmatpush1.msra.mxu0 %v1312
        %1433 = vmatprep.subr.mxu0 0.0
        %1434 = vmatpush1.msra.mxu0 %v1313
        %1435 = vmatprep.subr.mxu0 0.0
        %1436 = vmatpush1.msra.mxu0 %v1314
        %1437 = vmatprep.subr.mxu0 0.0
        %1438 = vmatpush1.msra.mxu0 %v1315
        %1439 = vmatprep.subr.mxu0 0.0
        %1440 = vmatpush1.msra.mxu0 %v1316
        %1441 = vmatprep.subr.mxu0 0.0
        %1442 = vmatpush1.msra.mxu0 %v1317
        %1443 = vmatprep.subr.mxu0 0.0
        %1444 = vmatpush1.msra.mxu0 %v1318
        %1445 = vmatprep.subr.mxu0 0.0
        %1446 = vmatpush1.msra.mxu0 %v1319
        %1447 = vmatprep.subr.mxu0 0.0
        %1448 = vmatpush1.msra.mxu0 %v1320
        %1449 = vmatprep.subr.mxu0 0.0
        %1450 = vmatpush1.msra.mxu0 %v1321
        %1451 = vmatprep.subr.mxu0 0.0
        %1452 = vmatpush1.msra.mxu0 %v1322
        %1453 = vmatprep.subr.mxu0 0.0
        %1454 = vmatpush1.msra.mxu0 %v1323
        %1455 = vmatprep.subr.mxu0 0.0
        %1456 = vmatpush1.msra.mxu0 %v1324
        %1457 = vmatprep.subr.mxu0 0.0
        %1458 = vmatpush1.msra.mxu0 %v1325
        %1459 = vmatprep.subr.mxu0 0.0
        %1460 = vmatpush1.msra.mxu0 %v1326
        %1461 = vmatprep.subr.mxu0 0.0
        %1462 = vmatpush1.msra.mxu0 %v1327
        %1463 = vmatprep.mubr.f32.mxu0 %v1346
        %1464 = vmatmul.mubr.f32.gmra.mrb[0].mxu0 %v1345
        %v1465 = vpop.f32.mrb[0].mxu0
        %v1466 = vadd.f32 %v1397, %v1465
        %v1467 = vpop.f32.mrb[0].mxu0
        %1468 = vmatprep.mubr.f32.mxu0 %v1349
        %1469 = vmatmul.mubr.f32.gmra.mrb[0].mxu0 %v1348
        %v1470 = vpop.f32.mrb[0].mxu0
        %v1471 = vadd.f32 %v1397, %v1470
        %v1472 = vpop.f32.mrb[0].mxu0
        %1473 = vmatprep.mubr.f32.mxu0 %v1352
        %1474 = vmatmul.mubr.f32.gmra.mrb[0].mxu0 %v1351
        %v1475 = vpop.f32.mrb[0].mxu0
        %v1476 = vadd.f32 %v1397, %v1475
        %v1477 = vpop.f32.mrb[0].mxu0
        %1478 = vmatprep.mubr.f32.mxu0 %v1355
        %1479 = vmatmul.mubr.f32.gmra.mrb[0].mxu0 %v1354
        %v1480 = vpop.f32.mrb[0].mxu0
        %v1481 = vadd.f32 %v1397, %v1480
        %v1482 = vpop.f32.mrb[0].mxu0
        %1483 = vmatprep.mubr.f32.mxu0 %v1358
        %1484 = vmatmul.mubr.f32.gmra.mrb[0].mxu0 %v1357
        %v1485 = vpop.f32.mrb[0].mxu0
        %v1486 = vadd.f32 %v1397, %v1485
        %v1487 = vpop.f32.mrb[0].mxu0
        %1488 = vmatprep.mubr.f32.mxu0 %v1361
        %1489 = vmatmul.mubr.f32.gmra.mrb[0].mxu0 %v1360
        %v1490 = vpop.f32.mrb[0].mxu0
        %v1491 = vadd.f32 %v1397, %v1490
        %v1492 = vpop.f32.mrb[0].mxu0
        %1493 = vmatprep.mubr.f32.mxu0 %v1364
        %1494 = vmatmul.mubr.f32.gmra.mrb[0].mxu0 %v1363
        %v1495 = vpop.f32.mrb[0].mxu0
        %v1496 = vadd.f32 %v1397, %v1495
        %v1497 = vpop.f32.mrb[0].mxu0
        %1498 = vmatprep.mubr.f32.mxu0 %v1367
        %1499 = vmatmul.mubr.f32.gmra.mrb[0].mxu0 %v1366
        %v1500 = vpop.f32.mrb[0].mxu0
        %v1501 = vadd.f32 %v1397, %v1500
        %v1502 = vpop.f32.mrb[0].mxu0
        %1503 = vmatprep.mubr.f32.mxu0 %v1370
        %1504 = vmatmul.mubr.f32.gmra.mrb[0].mxu0 %v1369
        %v1505 = vpop.f32.mrb[0].mxu0
        %v1506 = vadd.f32 %v1397, %v1505
        %v1507 = vpop.f32.mrb[0].mxu0
        %1508 = vmatprep.mubr.f32.mxu0 %v1373
        %1509 = vmatmul.mubr.f32.gmra.mrb[0].mxu0 %v1372
        %v1510 = vpop.f32.mrb[0].mxu0
        %v1511 = vadd.f32 %v1397, %v1510
        %v1512 = vpop.f32.mrb[0].mxu0
        %1513 = vmatprep.mubr.f32.mxu0 %v1376
        %1514 = vmatmul.mubr.f32.gmra.mrb[0].mxu0 %v1375
        %v1515 = vpop.f32.mrb[0].mxu0
        %v1516 = vadd.f32 %v1397, %v1515
        %v1517 = vpop.f32.mrb[0].mxu0
        %1518 = vmatprep.mubr.f32.mxu0 %v1379
        %1519 = vmatmul.mubr.f32.gmra.mrb[0].mxu0 %v1378
        %v1520 = vpop.f32.mrb[0].mxu0
        %v1521 = vadd.f32 %v1397, %v1520
        %v1522 = vpop.f32.mrb[0].mxu0
        %1523 = vmatprep.mubr.f32.mxu0 %v1382
        %1524 = vmatmul.mubr.f32.gmra.mrb[0].mxu0 %v1381
        %v1525 = vpop.f32.mrb[0].mxu0
        %v1526 = vadd.f32 %v1397, %v1525
        %v1527 = vpop.f32.mrb[0].mxu0
        %1528 = vmatprep.mubr.f32.mxu0 %v1385
        %1529 = vmatmul.mubr.f32.gmra.mrb[0].mxu0 %v1384
        %v1530 = vpop.f32.mrb[0].mxu0
        %v1531 = vadd.f32 %v1397, %v1530
        %v1532 = vpop.f32.mrb[0].mxu0
        %1533 = vmatprep.mubr.f32.mxu0 %v1388
        %1534 = vmatmul.mubr.f32.gmra.mrb[0].mxu0 %v1387
        %v1535 = vpop.f32.mrb[0].mxu0
        %v1536 = vadd.f32 %v1397, %v1535
        %v1537 = vpop.f32.mrb[0].mxu0
        %1538 = vmatprep.mubr.f32.mxu0 %v1391
        %1539 = vmatmul.mubr.f32.gmra.mrb[0].mxu0 %v1390
        %v1540 = vpop.f32.mrb[0].mxu0
        %v1541 = vadd.f32 %v1397, %v1540
        %v1542 = vpop.f32.mrb[0].mxu0
        %1543 = vdwg.mxu0
        %1544 = vmatprep.subr.mxu0 0.0
        %1545 = vmatpush1.msra.mxu0 %v1328
        %1546 = vmatprep.subr.mxu0 0.0
        %1547 = vmatpush1.msra.mxu0 %v1329
        %1548 = vmatprep.subr.mxu0 0.0
        %1549 = vmatpush1.msra.mxu0 %v1330
        %1550 = vmatprep.subr.mxu0 0.0
        %1551 = vmatpush1.msra.mxu0 %v1331
        %1552 = vmatprep.subr.mxu0 0.0
        %1553 = vmatpush1.msra.mxu0 %v1332
        %1554 = vmatprep.subr.mxu0 0.0
        %1555 = vmatpush1.msra.mxu0 %v1333
        %1556 = vmatprep.subr.mxu0 0.0
        %1557 = vmatpush1.msra.mxu0 %v1334
        %1558 = vmatprep.subr.mxu0 0.0
        %1559 = vmatpush1.msra.mxu0 %v1335
        %1560 = vmatprep.subr.mxu0 0.0
        %1561 = vmatpush1.msra.mxu0 %v1336
        %1562 = vmatprep.subr.mxu0 0.0
        %1563 = vmatpush1.msra.mxu0 %v1337
        %1564 = vmatprep.subr.mxu0 0.0
        %1565 = vmatpush1.msra.mxu0 %v1338
        %1566 = vmatprep.subr.mxu0 0.0
        %1567 = vmatpush1.msra.mxu0 %v1339
        %1568 = vmatprep.subr.mxu0 0.0
        %1569 = vmatpush1.msra.mxu0 %v1340
        %1570 = vmatprep.subr.mxu0 0.0
        %1571 = vmatpush1.msra.mxu0 %v1341
        %1572 = vmatprep.subr.mxu0 0.0
        %1573 = vmatpush1.msra.mxu0 %v1342
        %1574 = vmatprep.subr.mxu0 0.0
        %1575 = vmatpush1.msra.mxu0 %v1343
        %1576 = vmatprep.subr.mxu0 0.0
        %1577 = vmatpush1.msra.mxu0 0.0
        %1578 = vmatprep.subr.mxu0 0.0
        %1579 = vmatpush1.msra.mxu0 0.0
        %1580 = vmatprep.subr.mxu0 0.0
        %1581 = vmatpush1.msra.mxu0 0.0
        %1582 = vmatprep.subr.mxu0 0.0
        %1583 = vmatpush1.msra.mxu0 0.0
        %1584 = vmatprep.subr.mxu0 0.0
        %1585 = vmatpush1.msra.mxu0 0.0
        %1586 = vmatprep.subr.mxu0 0.0
        %1587 = vmatpush1.msra.mxu0 0.0
        %1588 = vmatprep.subr.mxu0 0.0
        %1589 = vmatpush1.msra.mxu0 0.0
        %1590 = vmatprep.subr.mxu0 0.0
        %1591 = vmatpush1.msra.mxu0 0.0
        %1592 = vmatprep.subr.mxu0 0.0
        %1593 = vmatpush1.msra.mxu0 0.0
        %1594 = vmatprep.subr.mxu0 0.0
        %1595 = vmatpush1.msra.mxu0 0.0
        %1596 = vmatprep.subr.mxu0 0.0
        %1597 = vmatpush1.msra.mxu0 0.0
        %1598 = vmatprep.subr.mxu0 0.0
        %1599 = vmatpush1.msra.mxu0 0.0
        %1600 = vmatprep.subr.mxu0 0.0
        %1601 = vmatpush1.msra.mxu0 0.0
        %1602 = vmatprep.subr.mxu0 0.0
        %1603 = vmatpush1.msra.mxu0 0.0
        %1604 = vmatprep.subr.mxu0 0.0
        %1605 = vmatpush1.msra.mxu0 0.0
        %1606 = vmatprep.subr.mxu0 0.0
        %1607 = vmatpush1.msra.mxu0 0.0
        %1608 = vmatprep.mubr.f32.mxu0 0.0
        %1609 = vmatmul.mubr.f32.gmra.mrb[0].mxu0 %v1347
        %v1610 = vpop.f32.mrb[0].mxu0
        %v1611 = vadd.f32 %v1466, %v1610
        %v1612 = vpop.f32.mrb[0].mxu0
        %1613 = vmatprep.mubr.f32.mxu0 0.0
        %1614 = vmatmul.mubr.f32.gmra.mrb[0].mxu0 %v1350
        %v1615 = vpop.f32.mrb[0].mxu0
        %v1616 = vadd.f32 %v1471, %v1615
        %v1617 = vpop.f32.mrb[0].mxu0
        %1618 = vmatprep.mubr.f32.mxu0 0.0
        %1619 = vmatmul.mubr.f32.gmra.mrb[0].mxu0 %v1353
        %v1620 = vpop.f32.mrb[0].mxu0
        %v1621 = vadd.f32 %v1476, %v1620
        %v1622 = vpop.f32.mrb[0].mxu0
        %1623 = vmatprep.mubr.f32.mxu0 0.0
        %1624 = vmatmul.mubr.f32.gmra.mrb[0].mxu0 %v1356
        %v1625 = vpop.f32.mrb[0].mxu0
        %v1626 = vadd.f32 %v1481, %v1625
        %v1627 = vpop.f32.mrb[0].mxu0
        %1628 = vmatprep.mubr.f32.mxu0 0.0
        %1629 = vmatmul.mubr.f32.gmra.mrb[0].mxu0 %v1359
        %v1630 = vpop.f32.mrb[0].mxu0
        %v1631 = vadd.f32 %v1486, %v1630
        %v1632 = vpop.f32.mrb[0].mxu0
        %1633 = vmatprep.mubr.f32.mxu0 0.0
        %1634 = vmatmul.mubr.f32.gmra.mrb[0].mxu0 %v1362
        %v1635 = vpop.f32.mrb[0].mxu0
        %v1636 = vadd.f32 %v1491, %v1635
        %v1637 = vpop.f32.mrb[0].mxu0
        %1638 = vmatprep.mubr.f32.mxu0 0.0
        %1639 = vmatmul.mubr.f32.gmra.mrb[0].mxu0 %v1365
        %v1640 = vpop.f32.mrb[0].mxu0
        %v1641 = vadd.f32 %v1496, %v1640
        %v1642 = vpop.f32.mrb[0].mxu0
        %1643 = vmatprep.mubr.f32.mxu0 0.0
        %1644 = vmatmul.mubr.f32.gmra.mrb[0].mxu0 %v1368
        %v1645 = vpop.f32.mrb[0].mxu0
        %v1646 = vadd.f32 %v1501, %v1645
        %v1647 = vpop.f32.mrb[0].mxu0
        %1648 = vmatprep.mubr.f32.mxu0 0.0
        %1649 = vmatmul.mubr.f32.gmra.mrb[0].mxu0 %v1371
        %v1650 = vpop.f32.mrb[0].mxu0
        %v1651 = vadd.f32 %v1506, %v1650
        %v1652 = vpop.f32.mrb[0].mxu0
        %1653 = vmatprep.mubr.f32.mxu0 0.0
        %1654 = vmatmul.mubr.f32.gmra.mrb[0].mxu0 %v1374
        %v1655 = vpop.f32.mrb[0].mxu0
        %v1656 = vadd.f32 %v1511, %v1655
        %v1657 = vpop.f32.mrb[0].mxu0
        %1658 = vmatprep.mubr.f32.mxu0 0.0
        %1659 = vmatmul.mubr.f32.gmra.mrb[0].mxu0 %v1377
        %v1660 = vpop.f32.mrb[0].mxu0
        %v1661 = vadd.f32 %v1516, %v1660
        %v1662 = vpop.f32.mrb[0].mxu0
        %1663 = vmatprep.mubr.f32.mxu0 0.0
        %1664 = vmatmul.mubr.f32.gmra.mrb[0].mxu0 %v1380
        %v1665 = vpop.f32.mrb[0].mxu0
        %v1666 = vadd.f32 %v1521, %v1665
        %v1667 = vpop.f32.mrb[0].mxu0
        %1668 = vmatprep.mubr.f32.mxu0 0.0
        %1669 = vmatmul.mubr.f32.gmra.mrb[0].mxu0 %v1383
        %v1670 = vpop.f32.mrb[0].mxu0
        %v1671 = vadd.f32 %v1526, %v1670
        %v1672 = vpop.f32.mrb[0].mxu0
        %1673 = vmatprep.mubr.f32.mxu0 0.0
        %1674 = vmatmul.mubr.f32.gmra.mrb[0].mxu0 %v1386
        %v1675 = vpop.f32.mrb[0].mxu0
        %v1676 = vadd.f32 %v1531, %v1675
        %v1677 = vpop.f32.mrb[0].mxu0
        %1678 = vmatprep.mubr.f32.mxu0 0.0
        %1679 = vmatmul.mubr.f32.gmra.mrb[0].mxu0 %v1389
        %v1680 = vpop.f32.mrb[0].mxu0
        %v1681 = vadd.f32 %v1536, %v1680
        %v1682 = vpop.f32.mrb[0].mxu0
        %1683 = vmatprep.mubr.f32.mxu0 0.0
        %1684 = vmatmul.mubr.f32.gmra.mrb[0].mxu0 %v1392
        %v1685 = vpop.f32.mrb[0].mxu0
        %v1686 = vadd.f32 %v1541, %v1685
        %v1687 = vpop.f32.mrb[0].mxu0
        %1688 = vdwg.mxu0
        %v1689 = vmax.f32 %v1611, -9.0
        %v1690 = vmax.f32 %v1616, -9.0
        %v1691 = vmax.f32 %v1621, -9.0
        %v1692 = vmax.f32 %v1626, -9.0
        %v1693 = vmax.f32 %v1631, -9.0
        %v1694 = vmax.f32 %v1636, -9.0
        %v1695 = vmax.f32 %v1641, -9.0
        %v1696 = vmax.f32 %v1646, -9.0
        %v1697 = vmax.f32 %v1651, -9.0
        %v1698 = vmax.f32 %v1656, -9.0
        %v1699 = vmax.f32 %v1661, -9.0
        %v1700 = vmax.f32 %v1666, -9.0
        %v1701 = vmax.f32 %v1671, -9.0
        %v1702 = vmax.f32 %v1676, -9.0
        %v1703 = vmax.f32 %v1681, -9.0
        %v1704 = vmax.f32 %v1686, -9.0
        %v1705 = vmin.f32 %v1689, 9.0
        %v1706 = vmin.f32 %v1690, 9.0
        %v1707 = vmin.f32 %v1691, 9.0
        %v1708 = vmin.f32 %v1692, 9.0
        %v1709 = vmin.f32 %v1693, 9.0
        %v1710 = vmin.f32 %v1694, 9.0
        %v1711 = vmin.f32 %v1695, 9.0
        %v1712 = vmin.f32 %v1696, 9.0
        %v1713 = vmin.f32 %v1697, 9.0
        %v1714 = vmin.f32 %v1698, 9.0
        %v1715 = vmin.f32 %v1699, 9.0
        %v1716 = vmin.f32 %v1700, 9.0
        %v1717 = vmin.f32 %v1701, 9.0
        %v1718 = vmin.f32 %v1702, 9.0
        %v1719 = vmin.f32 %v1703, 9.0
        %v1720 = vmin.f32 %v1704, 9.0
        %v1721 = vmax.f32 %v1611, -5.0
        %v1722 = vmax.f32 %v1616, -5.0
        %v1723 = vmax.f32 %v1621, -5.0
        %v1724 = vmax.f32 %v1626, -5.0
        %v1725 = vmax.f32 %v1631, -5.0
        %v1726 = vmax.f32 %v1636, -5.0
        %v1727 = vmax.f32 %v1641, -5.0
        %v1728 = vmax.f32 %v1646, -5.0
        %v1729 = vmax.f32 %v1651, -5.0
        %v1730 = vmax.f32 %v1656, -5.0
        %v1731 = vmax.f32 %v1661, -5.0
        %v1732 = vmax.f32 %v1666, -5.0
        %v1733 = vmax.f32 %v1671, -5.0
        %v1734 = vmax.f32 %v1676, -5.0
        %v1735 = vmax.f32 %v1681, -5.0
        %v1736 = vmax.f32 %v1686, -5.0
        %v1737 = vmin.f32 %v1721, 2.0
        %v1738 = vmin.f32 %v1722, 2.0
        %v1739 = vmin.f32 %v1723, 2.0
        %v1740 = vmin.f32 %v1724, 2.0
        %v1741 = vmin.f32 %v1725, 2.0
        %v1742 = vmin.f32 %v1726, 2.0
        %v1743 = vmin.f32 %v1727, 2.0
        %v1744 = vmin.f32 %v1728, 2.0
        %v1745 = vmin.f32 %v1729, 2.0
        %v1746 = vmin.f32 %v1730, 2.0
        %v1747 = vmin.f32 %v1731, 2.0
        %v1748 = vmin.f32 %v1732, 2.0
        %v1749 = vmin.f32 %v1733, 2.0
        %v1750 = vmin.f32 %v1734, 2.0
        %v1751 = vmin.f32 %v1735, 2.0
        %v1752 = vmin.f32 %v1736, 2.0
        %v1753 = vmul.f32 %v1737, 1.442695
        %v1754 = vpow.pop %v1753
        %v1755 = vmul.f32 %v1738, 1.442695
        %v1756 = vpow.pop %v1755
        %v1757 = vmul.f32 %v1739, 1.442695
        %v1758 = vpow.pop %v1757
        %v1759 = vmul.f32 %v1740, 1.442695
        %v1760 = vpow.pop %v1759
        %v1761 = vmul.f32 %v1741, 1.442695
        %v1762 = vpow.pop %v1761
        %v1763 = vmul.f32 %v1742, 1.442695
        %v1764 = vpow.pop %v1763
        %v1765 = vmul.f32 %v1743, 1.442695
        %v1766 = vpow.pop %v1765
        %v1767 = vmul.f32 %v1744, 1.442695
        %v1768 = vpow.pop %v1767
        %v1769 = vmul.f32 %v1745, 1.442695
        %v1770 = vpow.pop %v1769
        %v1771 = vmul.f32 %v1746, 1.442695
        %v1772 = vpow.pop %v1771
        %v1773 = vmul.f32 %v1747, 1.442695
        %v1774 = vpow.pop %v1773
        %v1775 = vmul.f32 %v1748, 1.442695
        %v1776 = vpow.pop %v1775
        %v1777 = vmul.f32 %v1749, 1.442695
        %v1778 = vpow.pop %v1777
        %v1779 = vmul.f32 %v1750, 1.442695
        %v1780 = vpow.pop %v1779
        %v1781 = vmul.f32 %v1751, 1.442695
        %v1782 = vpow.pop %v1781
        %v1783 = vmul.f32 %v1752, 1.442695
        %v1784 = vpow.pop %v1783
        %v1785 = vlaneseq
        %v1786 = vand.u32 %v1785, 127
        %vm1787 = vcmp.lt.s32.totalorder %v1786, 8
        %v1788 = vsel %vm1787, %v1705, %v1754
        %v1789 = vsel %vm1787, %v1706, %v1756
        %v1790 = vsel %vm1787, %v1707, %v1758
        %v1791 = vsel %vm1787, %v1708, %v1760
        %v1792 = vsel %vm1787, %v1709, %v1762
        %v1793 = vsel %vm1787, %v1710, %v1764
        %v1794 = vsel %vm1787, %v1711, %v1766
        %v1795 = vsel %vm1787, %v1712, %v1768
        %v1796 = vsel %vm1787, %v1713, %v1770
        %v1797 = vsel %vm1787, %v1714, %v1772
        %v1798 = vsel %vm1787, %v1715, %v1774
        %v1799 = vsel %vm1787, %v1716, %v1776
        %v1800 = vsel %vm1787, %v1717, %v1778
        %v1801 = vsel %vm1787, %v1718, %v1780
        %v1802 = vsel %vm1787, %v1719, %v1782
        %v1803 = vsel %vm1787, %v1720, %v1784
        %1804 = vst [vmem:[%s203] sm:$0xff] %v1788
        %1805 = vst [vmem:[%s203 + $0x8] sm:$0xff] %v1789
        %1806 = vst [vmem:[%s203 + $0x10] sm:$0xff] %v1790
        %1807 = vst [vmem:[%s203 + $0x18] sm:$0xff] %v1791
        %1808 = vst [vmem:[%s203 + $0x20] sm:$0xff] %v1792
        %1809 = vst [vmem:[%s203 + $0x28] sm:$0xff] %v1793
        %1810 = vst [vmem:[%s203 + $0x30] sm:$0xff] %v1794
        %1811 = vst [vmem:[%s203 + $0x38] sm:$0xff] %v1795
        %1812 = vst [vmem:[%s203 + $0x40] sm:$0xff] %v1796
        %1813 = vst [vmem:[%s203 + $0x48] sm:$0xff] %v1797
        %1814 = vst [vmem:[%s203 + $0x50] sm:$0xff] %v1798
        %1815 = vst [vmem:[%s203 + $0x58] sm:$0xff] %v1799
        %1816 = vst [vmem:[%s203 + $0x60] sm:$0xff] %v1800
        %1817 = vst [vmem:[%s203 + $0x68] sm:$0xff] %v1801
        %1818 = vst [vmem:[%s203 + $0x70] sm:$0xff] %v1802
        %1819 = vst [vmem:[%s203 + $0x78] sm:$0xff] %v1803
        %s1820 = sand.u32 %s97, 1
        %s1821 = scalar_lea.sflag [#allocation5], %s1820
        %s1822 = sand.u32 %s97, 1
        %s1823 = smul.addr %s1822, 128
        %s1824 = scalar_lea.vmem [#allocation8], %s1823
        // Predicated region
        $region41: #{tpu_custom_call.1} parent=31 // pred_check
          %p1825 = pneg %p107
        $region42: #{tpu_custom_call.1} parent=31 // pred_check_branch
          %1827 = sbr.rel (%p1825) target = $region44
        $region43: #{tpu_custom_call.1} parent=31 // pred_region
          %s1828 = smul.u32 16, %s21
          %s1830 = ssub.s32 2048, 2048
          %1831 = vsyncadd %s1821, %s1830
          %s1832 = smul.addr %s1828, 128
          %s1833 = scalar_lea.hbm %s3, %s1832
          %s1834 = sshll.u32 %s1824, 4
          %s1835 = int_to_ptr.vmem [resolvable:$true] %s1834
          %1840 = dma.vmem_to_hbm [thread:$0]  %s1835, 2048, %s1833, %s1821, 128, 128, 8
        $region44: #{tpu_custom_call.1} parent=31 // pred_fallthru
          _
      $region32: #{tpu_custom_call.1} parent=5 // pred_fallthru
        _
      %p1841 = scmp.le.s32.totalorder 2, %s16
      // Predicated region
      $region45: #{tpu_custom_call.1} parent=5 // pred_check
        %p1842 = pneg %p1841
      $region46: #{tpu_custom_call.1} parent=5 // pred_check_branch
        %1844 = sbr.rel (%p1842) target = $region48
      $region47: #{tpu_custom_call.1} parent=5 // pred_region
        %s1845 = ssub.s32 %s16, 2
        // Predicated region
        $region49: #{tpu_custom_call.1} parent=47 // pred_check
          %p1846 = pneg %p113
        $region50: #{tpu_custom_call.1} parent=47 // pred_check_branch
          %1848 = sbr.rel (%p1846) target = $region52
        $region51: #{tpu_custom_call.1} parent=47 // pred_region
          %s1849 = sand.u32 %s98, 1
          %s1850 = scalar_lea.sflag [#allocation5], %s1849
          %s1851 = sand.u32 %s98, 1
          %s1852 = smul.addr %s1851, 128
          %s1853 = scalar_lea.vmem [#allocation8], %s1852
          %1854 = dma.done %s1850, 2048
        $region52: #{tpu_custom_call.1} parent=47 // pred_fallthru
          _
      $region48: #{tpu_custom_call.1} parent=5 // pred_fallthru
        _
    $region6: #{tpu_custom_call.1} parent=1 // loop_footer
      %s20 = sadd.s32 1, %s16
    $region7: #{tpu_custom_call.1} parent=1 // loop_footer_branch
      %15 = sbr.rel target = $region3
    $region8: #{tpu_custom_call.1} parent=1 // loop_exit
      _
    %1855 = vsyncpa [#allocation4], 1
    %s1856 = scalar_lea.sflag [#allocation4], 1
    %1857 = vsyncpa %s1856, 1
    %1858 = vsyncpa [#allocation7], 1
    %1859 = vsyncpa [#allocation5], 1
    %s1860 = scalar_lea.sflag [#allocation5], 1
    %1861 = vsyncpa %s1860, 1

</llo_original>
